<compile_context>
chip_gen: v7x
topology: tpu7x:2x2x1
jax: 0.10.0
libtpu: 0.0.40
codegen_flags: <defaults>
</compile_context>

<pallas_src>
import functools

import jax
import jax.numpy as jnp
from jax.experimental import pallas as pl
from jax.experimental.pallas import tpu as pltpu


def _fusion_kernel(w_ref, text_ref, audio_ref, video_ref, out_ref, *,
                   d_text, d_audio):
    """Scale each modality by its scalar weight; store into output lane slices."""
    dt = out_ref.dtype
    w1 = w_ref[0].astype(dt)
    w2 = w_ref[1].astype(dt)
    w3 = w_ref[2].astype(dt)
    # Static sub-slice stores (no concatenate, no XLU relayout). These are
    # unmasked lane-dense vst whenever d_text and d_text + d_audio are
    # multiples of 128 (true for the demo shapes).
    out_ref[:, :d_text] = text_ref[...] * w1
    out_ref[:, d_text:d_text + d_audio] = audio_ref[...] * w2
    out_ref[:, d_text + d_audio:] = video_ref[...] * w3


def modality_fusion(text, audio, video, weights, *,
                    vmem_budget_bytes=24 * 1024 * 1024):
    """Pallas ModalityFusion forward.

    Args:
      text:  (B, S, Dt)
      audio: (B, S, Da)
      video: (B, S, Dv)
      weights: (3,) float32 -- [weight_1, weight_2, weight_3]
      vmem_budget_bytes: target double-buffered VMEM working set per core.

    Returns:
      (B, S, Dt + Da + Dv), same dtype as `text`.
    """
    B, S, Dt = text.shape
    _, _, Da = audio.shape
    _, _, Dv = video.shape
    D_out = Dt + Da + Dv
    dtype = text.dtype
    itemsize = jnp.dtype(dtype).itemsize

    rows = B * S
    t2 = text.reshape(rows, Dt)
    a2 = audio.reshape(rows, Da)
    v2 = video.reshape(rows, Dv)

    # Sublane packing: 8 rows/vreg for 32-bit, 16 for bf16, 32 for 8-bit.
    sub = 8 * max(1, 4 // itemsize)

    # Double-buffered working set per token row: 3 inputs + 1 output, x2 bufs.
    bytes_per_row = 2 * (Dt + Da + Dv + D_out) * itemsize
    tr_budget = max(sub, (vmem_budget_bytes // bytes_per_row) // sub * sub)

    if rows <= tr_budget:
        # Whole problem fits the VMEM budget: single block, no pipeline
        # prologue/epilogue.  Full-array block dims are exempt from the
        # (8, 128) divisibility rule, so `rows` need not be sublane-aligned.
        tr = rows
        grid = (1,)
    else:
        tr = tr_budget
        # Pad-free ragged tail: Pallas masks the out-of-bounds part of the
        # last block (reads padded, writes clipped), so no jnp.pad copies or
        # output slicing are needed.
        grid = (pl.cdiv(rows, tr),)

    working_set = 2 * tr * (Dt + Da + Dv + D_out) * itemsize
    vmem_limit = int(working_set * 1.25) + (1 << 20)
    vmem_limit = min(max(vmem_limit, 16 << 20), 64 << 20)

    kernel = functools.partial(_fusion_kernel, d_text=Dt, d_audio=Da)

    cost = pl.CostEstimate(
        flops=rows * D_out,                          # one multiply per output
        transcendentals=0,
        bytes_accessed=2 * rows * D_out * itemsize,  # read inputs + write out
    )

    # TODO(synk): if Dt or Dt+Da is ever not a multiple of 128, emit three
    # separate lane-dense outputs (or pad features) to avoid masked stores.
    out2 = pl.pallas_call(
        kernel,
        out_shape=jax.ShapeDtypeStruct((rows, D_out), dtype),
        grid=grid,
        in_specs=[
            pl.BlockSpec(memory_space=pltpu.SMEM),        # (3,) scalar weights
            pl.BlockSpec((tr, Dt), lambda i: (i, 0)),      # text tile
            pl.BlockSpec((tr, Da), lambda i: (i, 0)),      # audio tile
            pl.BlockSpec((tr, Dv), lambda i: (i, 0)),      # video tile
        ],
        out_specs=pl.BlockSpec((tr, D_out), lambda i: (i, 0)),
        compiler_params=pltpu.CompilerParams(
            dimension_semantics=("parallel",),             # megacore sharding
            vmem_limit_bytes=vmem_limit,
        ),
        cost_estimate=cost,
    )(weights, t2, a2, v2)

    return out2.reshape(B, S, D_out)


if __name__ == "__main__":
    key = jax.random.PRNGKey(0)
    k_text, k_audio, k_video = jax.random.split(key, 3)

    # Small shapes: lane-dense (128-multiple) feature dims; B*S = 1024 tokens
    # hits the single-block fast path at the default VMEM budget.
    B, S = 2, 512
    Dt, Da, Dv = 128, 128, 128
    text = jax.random.normal(k_text, (B, S, Dt), dtype=jnp.float32)
    audio = jax.random.normal(k_audio, (B, S, Da), dtype=jnp.float32)
    video = jax.random.normal(k_video, (B, S, Dv), dtype=jnp.float32)

    # Module init: nn.Parameter(torch.ones(1)) x3.
    weights_init = jnp.ones((3,), dtype=jnp.float32)

    out = jax.block_until_ready(modality_fusion(text, audio, video, weights_init))
    ref = jnp.concatenate(
        [text * weights_init[0], audio * weights_init[1], video * weights_init[2]],
        axis=-1,
    )
    assert out.shape == (B, S, Dt + Da + Dv)
    assert jnp.allclose(out, ref, atol=1e-6), "mismatch vs reference (init weights)"

    # Distinct (trained-like) weights to validate per-modality scaling.
    weights2 = jnp.array([0.5, 1.5, -2.0], dtype=jnp.float32)
    out2 = jax.block_until_ready(modality_fusion(text, audio, video, weights2))
    ref2 = jnp.concatenate(
        [text * weights2[0], audio * weights2[1], video * weights2[2]], axis=-1
    )
    assert jnp.allclose(out2, ref2, atol=1e-6), "mismatch vs reference (distinct weights)"

    # Tiny VMEM budget forces a multi-step grid with a ragged last block,
    # verifying the pad-free boundary-masked path used for large inputs.
    out3 = jax.block_until_ready(
        modality_fusion(text, audio, video, weights2, vmem_budget_bytes=1 << 20)
    )
    assert jnp.allclose(out3, ref2, atol=1e-6), "mismatch vs reference (tiled/ragged path)"

    print("KERNEL_OK")
</pallas_src>

<mosaic_0001>
module attributes {stable_mosaic.version = 11 : i64} {
  func.func @_fusion_kernel(%arg0: i32, %arg1: memref<3xf32, #tpu.memory_space<smem>>, %arg2: memref<1024x128xf32, #tpu.memory_space<vmem>>, %arg3: memref<1024x128xf32, #tpu.memory_space<vmem>>, %arg4: memref<1024x128xf32, #tpu.memory_space<vmem>>, %arg5: memref<1024x384xf32, #tpu.memory_space<vmem>>) attributes {dimension_semantics = [#tpu.dimension_semantics<parallel>], iteration_bounds = array<i64: 1>, scalar_prefetch = 0 : i64, scratch_operands = 0 : i64, tpu.core_type = #tpu.core_type<tc>, window_params = [{transform_indices = @transform_0, window_bounds = array<i64: 3>}, {transform_indices = @transform_1, window_bounds = array<i64: 1024, 128>}, {transform_indices = @transform_2, window_bounds = array<i64: 1024, 128>}, {transform_indices = @transform_3, window_bounds = array<i64: 1024, 128>}, {transform_indices = @transform_4, window_bounds = array<i64: 1024, 384>}]} {
    %c0 = arith.constant 0 : index
    %0 = memref.load %arg1[%c0] : memref<3xf32, #tpu.memory_space<smem>>
    %c1 = arith.constant 1 : index
    %1 = memref.load %arg1[%c1] : memref<3xf32, #tpu.memory_space<smem>>
    %c2 = arith.constant 2 : index
    %2 = memref.load %arg1[%c2] : memref<3xf32, #tpu.memory_space<smem>>
    %c0_0 = arith.constant 0 : index
    %c0_1 = arith.constant 0 : index
    %3 = vector.load %arg2[%c0_0, %c0_1] : memref<1024x128xf32, #tpu.memory_space<vmem>>, vector<1024x128xf32>
    %4 = vector.broadcast %0 : f32 to vector<1024x128xf32>
    %5 = arith.mulf %3, %4 : vector<1024x128xf32>
    %c0_2 = arith.constant 0 : index
    %c0_3 = arith.constant 0 : index
    %6 = vector.load %arg5[%c0_2, %c0_3] : memref<1024x384xf32, #tpu.memory_space<vmem>>, vector<1024x128xf32>
    tpu.vector_store %arg5[%c0_2, %c0_3], %5 {strides = array<i32>} : memref<1024x384xf32, #tpu.memory_space<vmem>>, vector<1024x128xf32>,
    %c0_4 = arith.constant 0 : index
    %c0_5 = arith.constant 0 : index
    %7 = vector.load %arg3[%c0_4, %c0_5] : memref<1024x128xf32, #tpu.memory_space<vmem>>, vector<1024x128xf32>
    %8 = vector.broadcast %1 : f32 to vector<1024x128xf32>
    %9 = arith.mulf %7, %8 : vector<1024x128xf32>
    %c0_6 = arith.constant 0 : index
    %c128 = arith.constant 128 : index
    %10 = vector.load %arg5[%c0_6, %c128] : memref<1024x384xf32, #tpu.memory_space<vmem>>, vector<1024x128xf32>
    tpu.vector_store %arg5[%c0_6, %c128], %9 {strides = array<i32>} : memref<1024x384xf32, #tpu.memory_space<vmem>>, vector<1024x128xf32>,
    %c0_7 = arith.constant 0 : index
    %c0_8 = arith.constant 0 : index
    %11 = vector.load %arg4[%c0_7, %c0_8] : memref<1024x128xf32, #tpu.memory_space<vmem>>, vector<1024x128xf32>
    %12 = vector.broadcast %2 : f32 to vector<1024x128xf32>
    %13 = arith.mulf %11, %12 : vector<1024x128xf32>
    %c0_9 = arith.constant 0 : index
    %c256 = arith.constant 256 : index
    %14 = vector.load %arg5[%c0_9, %c256] : memref<1024x384xf32, #tpu.memory_space<vmem>>, vector<1024x128xf32>
    tpu.vector_store %arg5[%c0_9, %c256], %13 {strides = array<i32>} : memref<1024x384xf32, #tpu.memory_space<vmem>>, vector<1024x128xf32>,
    return
  }
  func.func @transform_0(%arg0: i32) -> i32 {
    %c0_i32 = arith.constant 0 : i32
    %c0_i32_0 = arith.constant 0 : i32
    return %c0_i32 : i32
  }
  func.func @transform_1(%arg0: i32) -> (i32, i32) {
    %c0_i32 = arith.constant 0 : i32
    %c0_i32_0 = arith.constant 0 : i32
    return %arg0, %c0_i32 : i32, i32
  }
  func.func @transform_2(%arg0: i32) -> (i32, i32) {
    %c0_i32 = arith.constant 0 : i32
    %c0_i32_0 = arith.constant 0 : i32
    return %arg0, %c0_i32 : i32, i32
  }
  func.func @transform_3(%arg0: i32) -> (i32, i32) {
    %c0_i32 = arith.constant 0 : i32
    %c0_i32_0 = arith.constant 0 : i32
    return %arg0, %c0_i32 : i32, i32
  }
  func.func @transform_4(%arg0: i32) -> (i32, i32) {
    %c0_i32 = arith.constant 0 : i32
    %c0_i32_0 = arith.constant 0 : i32
    return %arg0, %c0_i32 : i32, i32
  }
}

</mosaic_0001>

<llo_original>
// kernel: tpu_custom_call.1
$region0: #{tpu_custom_call.1}
  #allocation0 [shape = 'u32[]', space=smem, size = 0x4, offset = 0x4, fixed_abs, tag = 'smem constant byte address 0x4 - core index']
  #allocation1 [shape = 'u32[144,128]{1,0:T(1,128)}', space=vmem, size = 0x12000, scoped, tag = 'internal scratch']
  %s0 = inlined_call_operand.hbm [shape: f32[3], index: 0, kind: input, shape index: {}]
  %s1 = inlined_call_operand.hbm [shape: f32[1024,128], index: 1, kind: input, shape index: {}]
  %s2 = inlined_call_operand.hbm [shape: f32[1024,128], index: 2, kind: input, shape index: {}]
  %s3 = inlined_call_operand.hbm [shape: f32[1024,128], index: 3, kind: input, shape index: {}]
  %s4 = inlined_call_operand.hbm [shape: f32[1024,384], index: 4, kind: output, shape index: {}]
  %s5 = sld [smem:[#allocation0]]
  $region42: #{tpu_custom_call.1} parent=0
    _
  %s7 = ssub.s32 1, %s5
  %s8 = scalar_select 0, %s7, %s5
  $region1: #{tpu_custom_call.1} parent=0
    #allocation2 [shape = 'u8[512]{0}', space=smem, size = 0x200, scoped, tag = 'input window, operand 0, single buffered']
    #allocation3 [shape = 's32[1]{0}', space=sflag, size = 0x4, scoped, tag = 'scoped memory for tpu_custom_call.1']
    #allocation4 [shape = 's32[1]{0}', space=sflag, size = 0x4, scoped, tag = 'scoped memory for tpu_custom_call.1']
    #allocation5 [shape = 's32[1]{0}', space=sflag, size = 0x4, scoped, tag = 'scoped memory for tpu_custom_call.1']
    #allocation6 [shape = 'u8[524288]{0}', space=vmem, size = 0x80000, scoped, tag = 'input window, operand 1, single buffered']
    #allocation7 [shape = 'u8[524288]{0}', space=vmem, size = 0x80000, scoped, tag = 'input window, operand 2, single buffered']
    #allocation8 [shape = 's32[1]{0}', space=sflag, size = 0x4, scoped, tag = 'scoped memory for tpu_custom_call.1']
    #allocation9 [shape = 'u8[524288]{0}', space=vmem, size = 0x80000, scoped, tag = 'input window, operand 3, single buffered']
    #allocation10 [shape = 'u8[1572864]{0}', space=vmem, size = 0x180000, scoped, tag = 'output window, operand 0, single buffered']
    %9 = vsyncpa [#allocation5], 0
    %10 = vsyncpa [#allocation3], 0
    %11 = vsyncpa [#allocation8], 0
    %12 = vsyncpa [#allocation4], 0
    // Predicated region
    $region2: #{tpu_custom_call.1} parent=1 // pred_check
      _
    $region3: #{tpu_custom_call.1} parent=1 // pred_check_branch
      %14 = sbr.rel (0) target = $region5
    $region4: #{tpu_custom_call.1} parent=1 // pred_region
      %s16 = ssub.s32 16, 16
      %17 = vsyncadd [#allocation5], %s16
      %20 = dma.hbm_to_smem %s0, 16, [#allocation2], [#allocation5]
    $region5: #{tpu_custom_call.1} parent=1 // pred_fallthru
      _
    // Predicated region
    $region6: #{tpu_custom_call.1} parent=1 // pred_check
      _
    $region7: #{tpu_custom_call.1} parent=1 // pred_check_branch
      %22 = sbr.rel (0) target = $region9
    $region8: #{tpu_custom_call.1} parent=1 // pred_region
      %s24 = ssub.s32 16384, 16384
      %25 = vsyncadd [#allocation3], %s24
      %s26 = sshll.u32 [#allocation6], 4
      %s27 = int_to_ptr.vmem [resolvable:$true] %s26
      %32 = dma.hbm_to_vmem [thread:$0]  %s1, 16384, %s27, [#allocation3], 128, 128, 8
    $region9: #{tpu_custom_call.1} parent=1 // pred_fallthru
      _
    // Predicated region
    $region10: #{tpu_custom_call.1} parent=1 // pred_check
      _
    $region11: #{tpu_custom_call.1} parent=1 // pred_check_branch
      %34 = sbr.rel (0) target = $region13
    $region12: #{tpu_custom_call.1} parent=1 // pred_region
      %s36 = ssub.s32 16384, 16384
      %37 = vsyncadd [#allocation8], %s36
      %s38 = sshll.u32 [#allocation7], 4
      %s39 = int_to_ptr.vmem [resolvable:$true] %s38
      %44 = dma.hbm_to_vmem [thread:$0]  %s2, 16384, %s39, [#allocation8], 128, 128, 8
    $region13: #{tpu_custom_call.1} parent=1 // pred_fallthru
      _
    // Predicated region
    $region14: #{tpu_custom_call.1} parent=1 // pred_check
      _
    $region15: #{tpu_custom_call.1} parent=1 // pred_check_branch
      %46 = sbr.rel (0) target = $region17
    $region16: #{tpu_custom_call.1} parent=1 // pred_region
      %s48 = ssub.s32 16384, 16384
      %49 = vsyncadd [#allocation8], %s48
      %s50 = sshll.u32 [#allocation9], 4
      %s51 = int_to_ptr.vmem [resolvable:$true] %s50
      %56 = dma.hbm_to_vmem [thread:$0]  %s3, 16384, %s51, [#allocation8], 128, 128, 8
    $region17: #{tpu_custom_call.1} parent=1 // pred_fallthru
      _
    // Predicated region
    $region18: #{tpu_custom_call.1} parent=1 // pred_check
      _
    $region19: #{tpu_custom_call.1} parent=1 // pred_check_branch
      %58 = sbr.rel (0) target = $region21
    $region20: #{tpu_custom_call.1} parent=1 // pred_region
      %59 = dma.done [#allocation5], 16
    $region21: #{tpu_custom_call.1} parent=1 // pred_fallthru
      _
    // Predicated region
    $region22: #{tpu_custom_call.1} parent=1 // pred_check
      _
    $region23: #{tpu_custom_call.1} parent=1 // pred_check_branch
      %61 = sbr.rel (0) target = $region25
    $region24: #{tpu_custom_call.1} parent=1 // pred_region
      %62 = dma.done [#allocation3], 16384
    $region25: #{tpu_custom_call.1} parent=1 // pred_fallthru
      _
    // Predicated region
    $region26: #{tpu_custom_call.1} parent=1 // pred_check
      _
    $region27: #{tpu_custom_call.1} parent=1 // pred_check_branch
      %64 = sbr.rel (0) target = $region29
    $region28: #{tpu_custom_call.1} parent=1 // pred_region
      %65 = dma.done [#allocation8], 16384
    $region29: #{tpu_custom_call.1} parent=1 // pred_fallthru
      _
    // Predicated region
    $region30: #{tpu_custom_call.1} parent=1 // pred_check
      _
    $region31: #{tpu_custom_call.1} parent=1 // pred_check_branch
      %67 = sbr.rel (0) target = $region33
    $region32: #{tpu_custom_call.1} parent=1 // pred_region
      %68 = dma.done [#allocation8], 16384
    $region33: #{tpu_custom_call.1} parent=1 // pred_fallthru
      _
    %69 = sfence
    %s70 = sld [smem:[#allocation2]]
    %s71 = sld [smem:[#allocation2 + $0x1]]
    %s72 = sld [smem:[#allocation2 + $0x2]]
    %v73 = vld [vmem:[#allocation6] sm:$0xff]
    %v74 = vld [vmem:[#allocation6 + $0x8] sm:$0xff]
    %v75 = vld [vmem:[#allocation6 + $0x10] sm:$0xff]
    %v76 = vld [vmem:[#allocation6 + $0x18] sm:$0xff]
    %v77 = vld [vmem:[#allocation6 + $0x20] sm:$0xff]
    %v78 = vld [vmem:[#allocation6 + $0x28] sm:$0xff]
    %v79 = vld [vmem:[#allocation6 + $0x30] sm:$0xff]
    %v80 = vld [vmem:[#allocation6 + $0x38] sm:$0xff]
    %v81 = vld [vmem:[#allocation6 + $0x40] sm:$0xff]
    %v82 = vld [vmem:[#allocation6 + $0x48] sm:$0xff]
    %v83 = vld [vmem:[#allocation6 + $0x50] sm:$0xff]
    %v84 = vld [vmem:[#allocation6 + $0x58] sm:$0xff]
    %v85 = vld [vmem:[#allocation6 + $0x60] sm:$0xff]
    %v86 = vld [vmem:[#allocation6 + $0x68] sm:$0xff]
    %v87 = vld [vmem:[#allocation6 + $0x70] sm:$0xff]
    %v88 = vld [vmem:[#allocation6 + $0x78] sm:$0xff]
    %v89 = vld [vmem:[#allocation6 + $0x80] sm:$0xff]
    %v90 = vld [vmem:[#allocation6 + $0x88] sm:$0xff]
    %v91 = vld [vmem:[#allocation6 + $0x90] sm:$0xff]
    %v92 = vld [vmem:[#allocation6 + $0x98] sm:$0xff]
    %v93 = vld [vmem:[#allocation6 + $0xa0] sm:$0xff]
    %v94 = vld [vmem:[#allocation6 + $0xa8] sm:$0xff]
    %v95 = vld [vmem:[#allocation6 + $0xb0] sm:$0xff]
    %v96 = vld [vmem:[#allocation6 + $0xb8] sm:$0xff]
    %v97 = vld [vmem:[#allocation6 + $0xc0] sm:$0xff]
    %v98 = vld [vmem:[#allocation6 + $0xc8] sm:$0xff]
    %v99 = vld [vmem:[#allocation6 + $0xd0] sm:$0xff]
    %v100 = vld [vmem:[#allocation6 + $0xd8] sm:$0xff]
    %v101 = vld [vmem:[#allocation6 + $0xe0] sm:$0xff]
    %v102 = vld [vmem:[#allocation6 + $0xe8] sm:$0xff]
    %v103 = vld [vmem:[#allocation6 + $0xf0] sm:$0xff]
    %v104 = vld [vmem:[#allocation6 + $0xf8] sm:$0xff]
    %v105 = vld [vmem:[#allocation6 + $0x100] sm:$0xff]
    %v106 = vld [vmem:[#allocation6 + $0x108] sm:$0xff]
    %v107 = vld [vmem:[#allocation6 + $0x110] sm:$0xff]
    %v108 = vld [vmem:[#allocation6 + $0x118] sm:$0xff]
    %v109 = vld [vmem:[#allocation6 + $0x120] sm:$0xff]
    %v110 = vld [vmem:[#allocation6 + $0x128] sm:$0xff]
    %v111 = vld [vmem:[#allocation6 + $0x130] sm:$0xff]
    %v112 = vld [vmem:[#allocation6 + $0x138] sm:$0xff]
    %v113 = vld [vmem:[#allocation6 + $0x140] sm:$0xff]
    %v114 = vld [vmem:[#allocation6 + $0x148] sm:$0xff]
    %v115 = vld [vmem:[#allocation6 + $0x150] sm:$0xff]
    %v116 = vld [vmem:[#allocation6 + $0x158] sm:$0xff]
    %v117 = vld [vmem:[#allocation6 + $0x160] sm:$0xff]
    %v118 = vld [vmem:[#allocation6 + $0x168] sm:$0xff]
    %v119 = vld [vmem:[#allocation6 + $0x170] sm:$0xff]
    %v120 = vld [vmem:[#allocation6 + $0x178] sm:$0xff]
    %v121 = vld [vmem:[#allocation6 + $0x180] sm:$0xff]
    %v122 = vld [vmem:[#allocation6 + $0x188] sm:$0xff]
    %v123 = vld [vmem:[#allocation6 + $0x190] sm:$0xff]
    %v124 = vld [vmem:[#allocation6 + $0x198] sm:$0xff]
    %v125 = vld [vmem:[#allocation6 + $0x1a0] sm:$0xff]
    %v126 = vld [vmem:[#allocation6 + $0x1a8] sm:$0xff]
    %v127 = vld [vmem:[#allocation6 + $0x1b0] sm:$0xff]
    %v128 = vld [vmem:[#allocation6 + $0x1b8] sm:$0xff]
    %v129 = vld [vmem:[#allocation6 + $0x1c0] sm:$0xff]
    %v130 = vld [vmem:[#allocation6 + $0x1c8] sm:$0xff]
    %v131 = vld [vmem:[#allocation6 + $0x1d0] sm:$0xff]
    %v132 = vld [vmem:[#allocation6 + $0x1d8] sm:$0xff]
    %v133 = vld [vmem:[#allocation6 + $0x1e0] sm:$0xff]
    %v134 = vld [vmem:[#allocation6 + $0x1e8] sm:$0xff]
    %v135 = vld [vmem:[#allocation6 + $0x1f0] sm:$0xff]
    %v136 = vld [vmem:[#allocation6 + $0x1f8] sm:$0xff]
    %v137 = vld [vmem:[#allocation6 + $0x200] sm:$0xff]
    %v138 = vld [vmem:[#allocation6 + $0x208] sm:$0xff]
    %v139 = vld [vmem:[#allocation6 + $0x210] sm:$0xff]
    %v140 = vld [vmem:[#allocation6 + $0x218] sm:$0xff]
    %v141 = vld [vmem:[#allocation6 + $0x220] sm:$0xff]
    %v142 = vld [vmem:[#allocation6 + $0x228] sm:$0xff]
    %v143 = vld [vmem:[#allocation6 + $0x230] sm:$0xff]
    %v144 = vld [vmem:[#allocation6 + $0x238] sm:$0xff]
    %v145 = vld [vmem:[#allocation6 + $0x240] sm:$0xff]
    %v146 = vld [vmem:[#allocation6 + $0x248] sm:$0xff]
    %v147 = vld [vmem:[#allocation6 + $0x250] sm:$0xff]
    %v148 = vld [vmem:[#allocation6 + $0x258] sm:$0xff]
    %v149 = vld [vmem:[#allocation6 + $0x260] sm:$0xff]
    %v150 = vld [vmem:[#allocation6 + $0x268] sm:$0xff]
    %v151 = vld [vmem:[#allocation6 + $0x270] sm:$0xff]
    %v152 = vld [vmem:[#allocation6 + $0x278] sm:$0xff]
    %v153 = vld [vmem:[#allocation6 + $0x280] sm:$0xff]
    %v154 = vld [vmem:[#allocation6 + $0x288] sm:$0xff]
    %v155 = vld [vmem:[#allocation6 + $0x290] sm:$0xff]
    %v156 = vld [vmem:[#allocation6 + $0x298] sm:$0xff]
    %v157 = vld [vmem:[#allocation6 + $0x2a0] sm:$0xff]
    %v158 = vld [vmem:[#allocation6 + $0x2a8] sm:$0xff]
    %v159 = vld [vmem:[#allocation6 + $0x2b0] sm:$0xff]
    %v160 = vld [vmem:[#allocation6 + $0x2b8] sm:$0xff]
    %v161 = vld [vmem:[#allocation6 + $0x2c0] sm:$0xff]
    %v162 = vld [vmem:[#allocation6 + $0x2c8] sm:$0xff]
    %v163 = vld [vmem:[#allocation6 + $0x2d0] sm:$0xff]
    %v164 = vld [vmem:[#allocation6 + $0x2d8] sm:$0xff]
    %v165 = vld [vmem:[#allocation6 + $0x2e0] sm:$0xff]
    %v166 = vld [vmem:[#allocation6 + $0x2e8] sm:$0xff]
    %v167 = vld [vmem:[#allocation6 + $0x2f0] sm:$0xff]
    %v168 = vld [vmem:[#allocation6 + $0x2f8] sm:$0xff]
    %v169 = vld [vmem:[#allocation6 + $0x300] sm:$0xff]
    %v170 = vld [vmem:[#allocation6 + $0x308] sm:$0xff]
    %v171 = vld [vmem:[#allocation6 + $0x310] sm:$0xff]
    %v172 = vld [vmem:[#allocation6 + $0x318] sm:$0xff]
    %v173 = vld [vmem:[#allocation6 + $0x320] sm:$0xff]
    %v174 = vld [vmem:[#allocation6 + $0x328] sm:$0xff]
    %v175 = vld [vmem:[#allocation6 + $0x330] sm:$0xff]
    %v176 = vld [vmem:[#allocation6 + $0x338] sm:$0xff]
    %v177 = vld [vmem:[#allocation6 + $0x340] sm:$0xff]
    %v178 = vld [vmem:[#allocation6 + $0x348] sm:$0xff]
    %v179 = vld [vmem:[#allocation6 + $0x350] sm:$0xff]
    %v180 = vld [vmem:[#allocation6 + $0x358] sm:$0xff]
    %v181 = vld [vmem:[#allocation6 + $0x360] sm:$0xff]
    %v182 = vld [vmem:[#allocation6 + $0x368] sm:$0xff]
    %v183 = vld [vmem:[#allocation6 + $0x370] sm:$0xff]
    %v184 = vld [vmem:[#allocation6 + $0x378] sm:$0xff]
    %v185 = vld [vmem:[#allocation6 + $0x380] sm:$0xff]
    %v186 = vld [vmem:[#allocation6 + $0x388] sm:$0xff]
    %v187 = vld [vmem:[#allocation6 + $0x390] sm:$0xff]
    %v188 = vld [vmem:[#allocation6 + $0x398] sm:$0xff]
    %v189 = vld [vmem:[#allocation6 + $0x3a0] sm:$0xff]
    %v190 = vld [vmem:[#allocation6 + $0x3a8] sm:$0xff]
    %v191 = vld [vmem:[#allocation6 + $0x3b0] sm:$0xff]
    %v192 = vld [vmem:[#allocation6 + $0x3b8] sm:$0xff]
    %v193 = vld [vmem:[#allocation6 + $0x3c0] sm:$0xff]
    %v194 = vld [vmem:[#allocation6 + $0x3c8] sm:$0xff]
    %v195 = vld [vmem:[#allocation6 + $0x3d0] sm:$0xff]
    %v196 = vld [vmem:[#allocation6 + $0x3d8] sm:$0xff]
    %v197 = vld [vmem:[#allocation6 + $0x3e0] sm:$0xff]
    %v198 = vld [vmem:[#allocation6 + $0x3e8] sm:$0xff]
    %v199 = vld [vmem:[#allocation6 + $0x3f0] sm:$0xff]
    %v200 = vld [vmem:[#allocation6 + $0x3f8] sm:$0xff]
    %v201 = vstv %s70
    %v202 = vmul.f32 %v73, %v201
    %v203 = vmul.f32 %v74, %v201
    %v204 = vmul.f32 %v75, %v201
    %v205 = vmul.f32 %v76, %v201
    %v206 = vmul.f32 %v77, %v201
    %v207 = vmul.f32 %v78, %v201
    %v208 = vmul.f32 %v79, %v201
    %v209 = vmul.f32 %v80, %v201
    %v210 = vmul.f32 %v81, %v201
    %v211 = vmul.f32 %v82, %v201
    %v212 = vmul.f32 %v83, %v201
    %v213 = vmul.f32 %v84, %v201
    %v214 = vmul.f32 %v85, %v201
    %v215 = vmul.f32 %v86, %v201
    %v216 = vmul.f32 %v87, %v201
    %v217 = vmul.f32 %v88, %v201
    %v218 = vmul.f32 %v89, %v201
    %v219 = vmul.f32 %v90, %v201
    %v220 = vmul.f32 %v91, %v201
    %v221 = vmul.f32 %v92, %v201
    %v222 = vmul.f32 %v93, %v201
    %v223 = vmul.f32 %v94, %v201
    %v224 = vmul.f32 %v95, %v201
    %v225 = vmul.f32 %v96, %v201
    %v226 = vmul.f32 %v97, %v201
    %v227 = vmul.f32 %v98, %v201
    %v228 = vmul.f32 %v99, %v201
    %v229 = vmul.f32 %v100, %v201
    %v230 = vmul.f32 %v101, %v201
    %v231 = vmul.f32 %v102, %v201
    %v232 = vmul.f32 %v103, %v201
    %v233 = vmul.f32 %v104, %v201
    %v234 = vmul.f32 %v105, %v201
    %v235 = vmul.f32 %v106, %v201
    %v236 = vmul.f32 %v107, %v201
    %v237 = vmul.f32 %v108, %v201
    %v238 = vmul.f32 %v109, %v201
    %v239 = vmul.f32 %v110, %v201
    %v240 = vmul.f32 %v111, %v201
    %v241 = vmul.f32 %v112, %v201
    %v242 = vmul.f32 %v113, %v201
    %v243 = vmul.f32 %v114, %v201
    %v244 = vmul.f32 %v115, %v201
    %v245 = vmul.f32 %v116, %v201
    %v246 = vmul.f32 %v117, %v201
    %v247 = vmul.f32 %v118, %v201
    %v248 = vmul.f32 %v119, %v201
    %v249 = vmul.f32 %v120, %v201
    %v250 = vmul.f32 %v121, %v201
    %v251 = vmul.f32 %v122, %v201
    %v252 = vmul.f32 %v123, %v201
    %v253 = vmul.f32 %v124, %v201
    %v254 = vmul.f32 %v125, %v201
    %v255 = vmul.f32 %v126, %v201
    %v256 = vmul.f32 %v127, %v201
    %v257 = vmul.f32 %v128, %v201
    %v258 = vmul.f32 %v129, %v201
    %v259 = vmul.f32 %v130, %v201
    %v260 = vmul.f32 %v131, %v201
    %v261 = vmul.f32 %v132, %v201
    %v262 = vmul.f32 %v133, %v201
    %v263 = vmul.f32 %v134, %v201
    %v264 = vmul.f32 %v135, %v201
    %v265 = vmul.f32 %v136, %v201
    %v266 = vmul.f32 %v137, %v201
    %v267 = vmul.f32 %v138, %v201
    %v268 = vmul.f32 %v139, %v201
    %v269 = vmul.f32 %v140, %v201
    %v270 = vmul.f32 %v141, %v201
    %v271 = vmul.f32 %v142, %v201
    %v272 = vmul.f32 %v143, %v201
    %v273 = vmul.f32 %v144, %v201
    %v274 = vmul.f32 %v145, %v201
    %v275 = vmul.f32 %v146, %v201
    %v276 = vmul.f32 %v147, %v201
    %v277 = vmul.f32 %v148, %v201
    %v278 = vmul.f32 %v149, %v201
    %v279 = vmul.f32 %v150, %v201
    %v280 = vmul.f32 %v151, %v201
    %v281 = vmul.f32 %v152, %v201
    %v282 = vmul.f32 %v153, %v201
    %v283 = vmul.f32 %v154, %v201
    %v284 = vmul.f32 %v155, %v201
    %v285 = vmul.f32 %v156, %v201
    %v286 = vmul.f32 %v157, %v201
    %v287 = vmul.f32 %v158, %v201
    %v288 = vmul.f32 %v159, %v201
    %v289 = vmul.f32 %v160, %v201
    %v290 = vmul.f32 %v161, %v201
    %v291 = vmul.f32 %v162, %v201
    %v292 = vmul.f32 %v163, %v201
    %v293 = vmul.f32 %v164, %v201
    %v294 = vmul.f32 %v165, %v201
    %v295 = vmul.f32 %v166, %v201
    %v296 = vmul.f32 %v167, %v201
    %v297 = vmul.f32 %v168, %v201
    %v298 = vmul.f32 %v169, %v201
    %v299 = vmul.f32 %v170, %v201
    %v300 = vmul.f32 %v171, %v201
    %v301 = vmul.f32 %v172, %v201
    %v302 = vmul.f32 %v173, %v201
    %v303 = vmul.f32 %v174, %v201
    %v304 = vmul.f32 %v175, %v201
    %v305 = vmul.f32 %v176, %v201
    %v306 = vmul.f32 %v177, %v201
    %v307 = vmul.f32 %v178, %v201
    %v308 = vmul.f32 %v179, %v201
    %v309 = vmul.f32 %v180, %v201
    %v310 = vmul.f32 %v181, %v201
    %v311 = vmul.f32 %v182, %v201
    %v312 = vmul.f32 %v183, %v201
    %v313 = vmul.f32 %v184, %v201
    %v314 = vmul.f32 %v185, %v201
    %v315 = vmul.f32 %v186, %v201
    %v316 = vmul.f32 %v187, %v201
    %v317 = vmul.f32 %v188, %v201
    %v318 = vmul.f32 %v189, %v201
    %v319 = vmul.f32 %v190, %v201
    %v320 = vmul.f32 %v191, %v201
    %v321 = vmul.f32 %v192, %v201
    %v322 = vmul.f32 %v193, %v201
    %v323 = vmul.f32 %v194, %v201
    %v324 = vmul.f32 %v195, %v201
    %v325 = vmul.f32 %v196, %v201
    %v326 = vmul.f32 %v197, %v201
    %v327 = vmul.f32 %v198, %v201
    %v328 = vmul.f32 %v199, %v201
    %v329 = vmul.f32 %v200, %v201
    %330 = vst [vmem:[#allocation10] sm:$0xff] %v202
    %331 = vst [vmem:[#allocation10 + $0x18] sm:$0xff] %v203
    %332 = vst [vmem:[#allocation10 + $0x30] sm:$0xff] %v204
    %333 = vst [vmem:[#allocation10 + $0x48] sm:$0xff] %v205
    %334 = vst [vmem:[#allocation10 + $0x60] sm:$0xff] %v206
    %335 = vst [vmem:[#allocation10 + $0x78] sm:$0xff] %v207
    %336 = vst [vmem:[#allocation10 + $0x90] sm:$0xff] %v208
    %337 = vst [vmem:[#allocation10 + $0xa8] sm:$0xff] %v209
    %338 = vst [vmem:[#allocation10 + $0xc0] sm:$0xff] %v210
    %339 = vst [vmem:[#allocation10 + $0xd8] sm:$0xff] %v211
    %340 = vst [vmem:[#allocation10 + $0xf0] sm:$0xff] %v212
    %341 = vst [vmem:[#allocation10 + $0x108] sm:$0xff] %v213
    %342 = vst [vmem:[#allocation10 + $0x120] sm:$0xff] %v214
    %343 = vst [vmem:[#allocation10 + $0x138] sm:$0xff] %v215
    %344 = vst [vmem:[#allocation10 + $0x150] sm:$0xff] %v216
    %345 = vst [vmem:[#allocation10 + $0x168] sm:$0xff] %v217
    %346 = vst [vmem:[#allocation10 + $0x180] sm:$0xff] %v218
    %347 = vst [vmem:[#allocation10 + $0x198] sm:$0xff] %v219
    %348 = vst [vmem:[#allocation10 + $0x1b0] sm:$0xff] %v220
    %349 = vst [vmem:[#allocation10 + $0x1c8] sm:$0xff] %v221
    %350 = vst [vmem:[#allocation10 + $0x1e0] sm:$0xff] %v222
    %351 = vst [vmem:[#allocation10 + $0x1f8] sm:$0xff] %v223
    %352 = vst [vmem:[#allocation10 + $0x210] sm:$0xff] %v224
    %353 = vst [vmem:[#allocation10 + $0x228] sm:$0xff] %v225
    %354 = vst [vmem:[#allocation10 + $0x240] sm:$0xff] %v226
    %355 = vst [vmem:[#allocation10 + $0x258] sm:$0xff] %v227
    %356 = vst [vmem:[#allocation10 + $0x270] sm:$0xff] %v228
    %357 = vst [vmem:[#allocation10 + $0x288] sm:$0xff] %v229
    %358 = vst [vmem:[#allocation10 + $0x2a0] sm:$0xff] %v230
    %359 = vst [vmem:[#allocation10 + $0x2b8] sm:$0xff] %v231
    %360 = vst [vmem:[#allocation10 + $0x2d0] sm:$0xff] %v232
    %361 = vst [vmem:[#allocation10 + $0x2e8] sm:$0xff] %v233
    %362 = vst [vmem:[#allocation10 + $0x300] sm:$0xff] %v234
    %363 = vst [vmem:[#allocation10 + $0x318] sm:$0xff] %v235
    %364 = vst [vmem:[#allocation10 + $0x330] sm:$0xff] %v236
    %365 = vst [vmem:[#allocation10 + $0x348] sm:$0xff] %v237
    %366 = vst [vmem:[#allocation10 + $0x360] sm:$0xff] %v238
    %367 = vst [vmem:[#allocation10 + $0x378] sm:$0xff] %v239
    %368 = vst [vmem:[#allocation10 + $0x390] sm:$0xff] %v240
    %369 = vst [vmem:[#allocation10 + $0x3a8] sm:$0xff] %v241
    %370 = vst [vmem:[#allocation10 + $0x3c0] sm:$0xff] %v242
    %371 = vst [vmem:[#allocation10 + $0x3d8] sm:$0xff] %v243
    %372 = vst [vmem:[#allocation10 + $0x3f0] sm:$0xff] %v244
    %373 = vst [vmem:[#allocation10 + $0x408] sm:$0xff] %v245
    %374 = vst [vmem:[#allocation10 + $0x420] sm:$0xff] %v246
    %375 = vst [vmem:[#allocation10 + $0x438] sm:$0xff] %v247
    %376 = vst [vmem:[#allocation10 + $0x450] sm:$0xff] %v248
    %377 = vst [vmem:[#allocation10 + $0x468] sm:$0xff] %v249
    %378 = vst [vmem:[#allocation10 + $0x480] sm:$0xff] %v250
    %379 = vst [vmem:[#allocation10 + $0x498] sm:$0xff] %v251
    %380 = vst [vmem:[#allocation10 + $0x4b0] sm:$0xff] %v252
    %381 = vst [vmem:[#allocation10 + $0x4c8] sm:$0xff] %v253
    %382 = vst [vmem:[#allocation10 + $0x4e0] sm:$0xff] %v254
    %383 = vst [vmem:[#allocation10 + $0x4f8] sm:$0xff] %v255
    %384 = vst [vmem:[#allocation10 + $0x510] sm:$0xff] %v256
    %385 = vst [vmem:[#allocation10 + $0x528] sm:$0xff] %v257
    %386 = vst [vmem:[#allocation10 + $0x540] sm:$0xff] %v258
    %387 = vst [vmem:[#allocation10 + $0x558] sm:$0xff] %v259
    %388 = vst [vmem:[#allocation10 + $0x570] sm:$0xff] %v260
    %389 = vst [vmem:[#allocation10 + $0x588] sm:$0xff] %v261
    %390 = vst [vmem:[#allocation10 + $0x5a0] sm:$0xff] %v262
    %391 = vst [vmem:[#allocation10 + $0x5b8] sm:$0xff] %v263
    %392 = vst [vmem:[#allocation10 + $0x5d0] sm:$0xff] %v264
    %393 = vst [vmem:[#allocation10 + $0x5e8] sm:$0xff] %v265
    %394 = vst [vmem:[#allocation10 + $0x600] sm:$0xff] %v266
    %395 = vst [vmem:[#allocation10 + $0x618] sm:$0xff] %v267
    %396 = vst [vmem:[#allocation10 + $0x630] sm:$0xff] %v268
    %397 = vst [vmem:[#allocation10 + $0x648] sm:$0xff] %v269
    %398 = vst [vmem:[#allocation10 + $0x660] sm:$0xff] %v270
    %399 = vst [vmem:[#allocation10 + $0x678] sm:$0xff] %v271
    %400 = vst [vmem:[#allocation10 + $0x690] sm:$0xff] %v272
    %401 = vst [vmem:[#allocation10 + $0x6a8] sm:$0xff] %v273
    %402 = vst [vmem:[#allocation10 + $0x6c0] sm:$0xff] %v274
    %403 = vst [vmem:[#allocation10 + $0x6d8] sm:$0xff] %v275
    %404 = vst [vmem:[#allocation10 + $0x6f0] sm:$0xff] %v276
    %405 = vst [vmem:[#allocation10 + $0x708] sm:$0xff] %v277
    %406 = vst [vmem:[#allocation10 + $0x720] sm:$0xff] %v278
    %407 = vst [vmem:[#allocation10 + $0x738] sm:$0xff] %v279
    %408 = vst [vmem:[#allocation10 + $0x750] sm:$0xff] %v280
    %409 = vst [vmem:[#allocation10 + $0x768] sm:$0xff] %v281
    %410 = vst [vmem:[#allocation10 + $0x780] sm:$0xff] %v282
    %411 = vst [vmem:[#allocation10 + $0x798] sm:$0xff] %v283
    %412 = vst [vmem:[#allocation10 + $0x7b0] sm:$0xff] %v284
    %413 = vst [vmem:[#allocation10 + $0x7c8] sm:$0xff] %v285
    %414 = vst [vmem:[#allocation10 + $0x7e0] sm:$0xff] %v286
    %415 = vst [vmem:[#allocation10 + $0x7f8] sm:$0xff] %v287
    %416 = vst [vmem:[#allocation10 + $0x810] sm:$0xff] %v288
    %417 = vst [vmem:[#allocation10 + $0x828] sm:$0xff] %v289
    %418 = vst [vmem:[#allocation10 + $0x840] sm:$0xff] %v290
    %419 = vst [vmem:[#allocation10 + $0x858] sm:$0xff] %v291
    %420 = vst [vmem:[#allocation10 + $0x870] sm:$0xff] %v292
    %421 = vst [vmem:[#allocation10 + $0x888] sm:$0xff] %v293
    %422 = vst [vmem:[#allocation10 + $0x8a0] sm:$0xff] %v294
    %423 = vst [vmem:[#allocation10 + $0x8b8] sm:$0xff] %v295
    %424 = vst [vmem:[#allocation10 + $0x8d0] sm:$0xff] %v296
    %425 = vst [vmem:[#allocation10 + $0x8e8] sm:$0xff] %v297
    %426 = vst [vmem:[#allocation10 + $0x900] sm:$0xff] %v298
    %427 = vst [vmem:[#allocation10 + $0x918] sm:$0xff] %v299
    %428 = vst [vmem:[#allocation10 + $0x930] sm:$0xff] %v300
    %429 = vst [vmem:[#allocation10 + $0x948] sm:$0xff] %v301
    %430 = vst [vmem:[#allocation10 + $0x960] sm:$0xff] %v302
    %431 = vst [vmem:[#allocation10 + $0x978] sm:$0xff] %v303
    %432 = vst [vmem:[#allocation10 + $0x990] sm:$0xff] %v304
    %433 = vst [vmem:[#allocation10 + $0x9a8] sm:$0xff] %v305
    %434 = vst [vmem:[#allocation10 + $0x9c0] sm:$0xff] %v306
    %435 = vst [vmem:[#allocation10 + $0x9d8] sm:$0xff] %v307
    %436 = vst [vmem:[#allocation10 + $0x9f0] sm:$0xff] %v308
    %437 = vst [vmem:[#allocation10 + $0xa08] sm:$0xff] %v309
    %438 = vst [vmem:[#allocation10 + $0xa20] sm:$0xff] %v310
    %439 = vst [vmem:[#allocation10 + $0xa38] sm:$0xff] %v311
    %440 = vst [vmem:[#allocation10 + $0xa50] sm:$0xff] %v312
    %441 = vst [vmem:[#allocation10 + $0xa68] sm:$0xff] %v313
    %442 = vst [vmem:[#allocation10 + $0xa80] sm:$0xff] %v314
    %443 = vst [vmem:[#allocation10 + $0xa98] sm:$0xff] %v315
    %444 = vst [vmem:[#allocation10 + $0xab0] sm:$0xff] %v316
    %445 = vst [vmem:[#allocation10 + $0xac8] sm:$0xff] %v317
    %446 = vst [vmem:[#allocation10 + $0xae0] sm:$0xff] %v318
    %447 = vst [vmem:[#allocation10 + $0xaf8] sm:$0xff] %v319
    %448 = vst [vmem:[#allocation10 + $0xb10] sm:$0xff] %v320
    %449 = vst [vmem:[#allocation10 + $0xb28] sm:$0xff] %v321
    %450 = vst [vmem:[#allocation10 + $0xb40] sm:$0xff] %v322
    %451 = vst [vmem:[#allocation10 + $0xb58] sm:$0xff] %v323
    %452 = vst [vmem:[#allocation10 + $0xb70] sm:$0xff] %v324
    %453 = vst [vmem:[#allocation10 + $0xb88] sm:$0xff] %v325
    %454 = vst [vmem:[#allocation10 + $0xba0] sm:$0xff] %v326
    %455 = vst [vmem:[#allocation10 + $0xbb8] sm:$0xff] %v327
    %456 = vst [vmem:[#allocation10 + $0xbd0] sm:$0xff] %v328
    %457 = vst [vmem:[#allocation10 + $0xbe8] sm:$0xff] %v329
    %v458 = vld [vmem:[#allocation7] sm:$0xff]
    %v459 = vld [vmem:[#allocation7 + $0x8] sm:$0xff]
    %v460 = vld [vmem:[#allocation7 + $0x10] sm:$0xff]
    %v461 = vld [vmem:[#allocation7 + $0x18] sm:$0xff]
    %v462 = vld [vmem:[#allocation7 + $0x20] sm:$0xff]
    %v463 = vld [vmem:[#allocation7 + $0x28] sm:$0xff]
    %v464 = vld [vmem:[#allocation7 + $0x30] sm:$0xff]
    %v465 = vld [vmem:[#allocation7 + $0x38] sm:$0xff]
    %v466 = vld [vmem:[#allocation7 + $0x40] sm:$0xff]
    %v467 = vld [vmem:[#allocation7 + $0x48] sm:$0xff]
    %v468 = vld [vmem:[#allocation7 + $0x50] sm:$0xff]
    %v469 = vld [vmem:[#allocation7 + $0x58] sm:$0xff]
    %v470 = vld [vmem:[#allocation7 + $0x60] sm:$0xff]
    %v471 = vld [vmem:[#allocation7 + $0x68] sm:$0xff]
    %v472 = vld [vmem:[#allocation7 + $0x70] sm:$0xff]
    %v473 = vld [vmem:[#allocation7 + $0x78] sm:$0xff]
    %v474 = vld [vmem:[#allocation7 + $0x80] sm:$0xff]
    %v475 = vld [vmem:[#allocation7 + $0x88] sm:$0xff]
    %v476 = vld [vmem:[#allocation7 + $0x90] sm:$0xff]
    %v477 = vld [vmem:[#allocation7 + $0x98] sm:$0xff]
    %v478 = vld [vmem:[#allocation7 + $0xa0] sm:$0xff]
    %v479 = vld [vmem:[#allocation7 + $0xa8] sm:$0xff]
    %v480 = vld [vmem:[#allocation7 + $0xb0] sm:$0xff]
    %v481 = vld [vmem:[#allocation7 + $0xb8] sm:$0xff]
    %v482 = vld [vmem:[#allocation7 + $0xc0] sm:$0xff]
    %v483 = vld [vmem:[#allocation7 + $0xc8] sm:$0xff]
    %v484 = vld [vmem:[#allocation7 + $0xd0] sm:$0xff]
    %v485 = vld [vmem:[#allocation7 + $0xd8] sm:$0xff]
    %v486 = vld [vmem:[#allocation7 + $0xe0] sm:$0xff]
    %v487 = vld [vmem:[#allocation7 + $0xe8] sm:$0xff]
    %v488 = vld [vmem:[#allocation7 + $0xf0] sm:$0xff]
    %v489 = vld [vmem:[#allocation7 + $0xf8] sm:$0xff]
    %v490 = vld [vmem:[#allocation7 + $0x100] sm:$0xff]
    %v491 = vld [vmem:[#allocation7 + $0x108] sm:$0xff]
    %v492 = vld [vmem:[#allocation7 + $0x110] sm:$0xff]
    %v493 = vld [vmem:[#allocation7 + $0x118] sm:$0xff]
    %v494 = vld [vmem:[#allocation7 + $0x120] sm:$0xff]
    %v495 = vld [vmem:[#allocation7 + $0x128] sm:$0xff]
    %v496 = vld [vmem:[#allocation7 + $0x130] sm:$0xff]
    %v497 = vld [vmem:[#allocation7 + $0x138] sm:$0xff]
    %v498 = vld [vmem:[#allocation7 + $0x140] sm:$0xff]
    %v499 = vld [vmem:[#allocation7 + $0x148] sm:$0xff]
    %v500 = vld [vmem:[#allocation7 + $0x150] sm:$0xff]
    %v501 = vld [vmem:[#allocation7 + $0x158] sm:$0xff]
    %v502 = vld [vmem:[#allocation7 + $0x160] sm:$0xff]
    %v503 = vld [vmem:[#allocation7 + $0x168] sm:$0xff]
    %v504 = vld [vmem:[#allocation7 + $0x170] sm:$0xff]
    %v505 = vld [vmem:[#allocation7 + $0x178] sm:$0xff]
    %v506 = vld [vmem:[#allocation7 + $0x180] sm:$0xff]
    %v507 = vld [vmem:[#allocation7 + $0x188] sm:$0xff]
    %v508 = vld [vmem:[#allocation7 + $0x190] sm:$0xff]
    %v509 = vld [vmem:[#allocation7 + $0x198] sm:$0xff]
    %v510 = vld [vmem:[#allocation7 + $0x1a0] sm:$0xff]
    %v511 = vld [vmem:[#allocation7 + $0x1a8] sm:$0xff]
    %v512 = vld [vmem:[#allocation7 + $0x1b0] sm:$0xff]
    %v513 = vld [vmem:[#allocation7 + $0x1b8] sm:$0xff]
    %v514 = vld [vmem:[#allocation7 + $0x1c0] sm:$0xff]
    %v515 = vld [vmem:[#allocation7 + $0x1c8] sm:$0xff]
    %v516 = vld [vmem:[#allocation7 + $0x1d0] sm:$0xff]
    %v517 = vld [vmem:[#allocation7 + $0x1d8] sm:$0xff]
    %v518 = vld [vmem:[#allocation7 + $0x1e0] sm:$0xff]
    %v519 = vld [vmem:[#allocation7 + $0x1e8] sm:$0xff]
    %v520 = vld [vmem:[#allocation7 + $0x1f0] sm:$0xff]
    %v521 = vld [vmem:[#allocation7 + $0x1f8] sm:$0xff]
    %v522 = vld [vmem:[#allocation7 + $0x200] sm:$0xff]
    %v523 = vld [vmem:[#allocation7 + $0x208] sm:$0xff]
    %v524 = vld [vmem:[#allocation7 + $0x210] sm:$0xff]
    %v525 = vld [vmem:[#allocation7 + $0x218] sm:$0xff]
    %v526 = vld [vmem:[#allocation7 + $0x220] sm:$0xff]
    %v527 = vld [vmem:[#allocation7 + $0x228] sm:$0xff]
    %v528 = vld [vmem:[#allocation7 + $0x230] sm:$0xff]
    %v529 = vld [vmem:[#allocation7 + $0x238] sm:$0xff]
    %v530 = vld [vmem:[#allocation7 + $0x240] sm:$0xff]
    %v531 = vld [vmem:[#allocation7 + $0x248] sm:$0xff]
    %v532 = vld [vmem:[#allocation7 + $0x250] sm:$0xff]
    %v533 = vld [vmem:[#allocation7 + $0x258] sm:$0xff]
    %v534 = vld [vmem:[#allocation7 + $0x260] sm:$0xff]
    %v535 = vld [vmem:[#allocation7 + $0x268] sm:$0xff]
    %v536 = vld [vmem:[#allocation7 + $0x270] sm:$0xff]
    %v537 = vld [vmem:[#allocation7 + $0x278] sm:$0xff]
    %v538 = vld [vmem:[#allocation7 + $0x280] sm:$0xff]
    %v539 = vld [vmem:[#allocation7 + $0x288] sm:$0xff]
    %v540 = vld [vmem:[#allocation7 + $0x290] sm:$0xff]
    %v541 = vld [vmem:[#allocation7 + $0x298] sm:$0xff]
    %v542 = vld [vmem:[#allocation7 + $0x2a0] sm:$0xff]
    %v543 = vld [vmem:[#allocation7 + $0x2a8] sm:$0xff]
    %v544 = vld [vmem:[#allocation7 + $0x2b0] sm:$0xff]
    %v545 = vld [vmem:[#allocation7 + $0x2b8] sm:$0xff]
    %v546 = vld [vmem:[#allocation7 + $0x2c0] sm:$0xff]
    %v547 = vld [vmem:[#allocation7 + $0x2c8] sm:$0xff]
    %v548 = vld [vmem:[#allocation7 + $0x2d0] sm:$0xff]
    %v549 = vld [vmem:[#allocation7 + $0x2d8] sm:$0xff]
    %v550 = vld [vmem:[#allocation7 + $0x2e0] sm:$0xff]
    %v551 = vld [vmem:[#allocation7 + $0x2e8] sm:$0xff]
    %v552 = vld [vmem:[#allocation7 + $0x2f0] sm:$0xff]
    %v553 = vld [vmem:[#allocation7 + $0x2f8] sm:$0xff]
    %v554 = vld [vmem:[#allocation7 + $0x300] sm:$0xff]
    %v555 = vld [vmem:[#allocation7 + $0x308] sm:$0xff]
    %v556 = vld [vmem:[#allocation7 + $0x310] sm:$0xff]
    %v557 = vld [vmem:[#allocation7 + $0x318] sm:$0xff]
    %v558 = vld [vmem:[#allocation7 + $0x320] sm:$0xff]
    %v559 = vld [vmem:[#allocation7 + $0x328] sm:$0xff]
    %v560 = vld [vmem:[#allocation7 + $0x330] sm:$0xff]
    %v561 = vld [vmem:[#allocation7 + $0x338] sm:$0xff]
    %v562 = vld [vmem:[#allocation7 + $0x340] sm:$0xff]
    %v563 = vld [vmem:[#allocation7 + $0x348] sm:$0xff]
    %v564 = vld [vmem:[#allocation7 + $0x350] sm:$0xff]
    %v565 = vld [vmem:[#allocation7 + $0x358] sm:$0xff]
    %v566 = vld [vmem:[#allocation7 + $0x360] sm:$0xff]
    %v567 = vld [vmem:[#allocation7 + $0x368] sm:$0xff]
    %v568 = vld [vmem:[#allocation7 + $0x370] sm:$0xff]
    %v569 = vld [vmem:[#allocation7 + $0x378] sm:$0xff]
    %v570 = vld [vmem:[#allocation7 + $0x380] sm:$0xff]
    %v571 = vld [vmem:[#allocation7 + $0x388] sm:$0xff]
    %v572 = vld [vmem:[#allocation7 + $0x390] sm:$0xff]
    %v573 = vld [vmem:[#allocation7 + $0x398] sm:$0xff]
    %v574 = vld [vmem:[#allocation7 + $0x3a0] sm:$0xff]
    %v575 = vld [vmem:[#allocation7 + $0x3a8] sm:$0xff]
    %v576 = vld [vmem:[#allocation7 + $0x3b0] sm:$0xff]
    %v577 = vld [vmem:[#allocation7 + $0x3b8] sm:$0xff]
    %v578 = vld [vmem:[#allocation7 + $0x3c0] sm:$0xff]
    %v579 = vld [vmem:[#allocation7 + $0x3c8] sm:$0xff]
    %v580 = vld [vmem:[#allocation7 + $0x3d0] sm:$0xff]
    %v581 = vld [vmem:[#allocation7 + $0x3d8] sm:$0xff]
    %v582 = vld [vmem:[#allocation7 + $0x3e0] sm:$0xff]
    %v583 = vld [vmem:[#allocation7 + $0x3e8] sm:$0xff]
    %v584 = vld [vmem:[#allocation7 + $0x3f0] sm:$0xff]
    %v585 = vld [vmem:[#allocation7 + $0x3f8] sm:$0xff]
    %v586 = vstv %s71
    %v587 = vmul.f32 %v458, %v586
    %v588 = vmul.f32 %v459, %v586
    %v589 = vmul.f32 %v460, %v586
    %v590 = vmul.f32 %v461, %v586
    %v591 = vmul.f32 %v462, %v586
    %v592 = vmul.f32 %v463, %v586
    %v593 = vmul.f32 %v464, %v586
    %v594 = vmul.f32 %v465, %v586
    %v595 = vmul.f32 %v466, %v586
    %v596 = vmul.f32 %v467, %v586
    %v597 = vmul.f32 %v468, %v586
    %v598 = vmul.f32 %v469, %v586
    %v599 = vmul.f32 %v470, %v586
    %v600 = vmul.f32 %v471, %v586
    %v601 = vmul.f32 %v472, %v586
    %v602 = vmul.f32 %v473, %v586
    %v603 = vmul.f32 %v474, %v586
    %v604 = vmul.f32 %v475, %v586
    %v605 = vmul.f32 %v476, %v586
    %v606 = vmul.f32 %v477, %v586
    %v607 = vmul.f32 %v478, %v586
    %v608 = vmul.f32 %v479, %v586
    %v609 = vmul.f32 %v480, %v586
    %v610 = vmul.f32 %v481, %v586
    %v611 = vmul.f32 %v482, %v586
    %v612 = vmul.f32 %v483, %v586
    %v613 = vmul.f32 %v484, %v586
    %v614 = vmul.f32 %v485, %v586
    %v615 = vmul.f32 %v486, %v586
    %v616 = vmul.f32 %v487, %v586
    %v617 = vmul.f32 %v488, %v586
    %v618 = vmul.f32 %v489, %v586
    %v619 = vmul.f32 %v490, %v586
    %v620 = vmul.f32 %v491, %v586
    %v621 = vmul.f32 %v492, %v586
    %v622 = vmul.f32 %v493, %v586
    %v623 = vmul.f32 %v494, %v586
    %v624 = vmul.f32 %v495, %v586
    %v625 = vmul.f32 %v496, %v586
    %v626 = vmul.f32 %v497, %v586
    %v627 = vmul.f32 %v498, %v586
    %v628 = vmul.f32 %v499, %v586
    %v629 = vmul.f32 %v500, %v586
    %v630 = vmul.f32 %v501, %v586
    %v631 = vmul.f32 %v502, %v586
    %v632 = vmul.f32 %v503, %v586
    %v633 = vmul.f32 %v504, %v586
    %v634 = vmul.f32 %v505, %v586
    %v635 = vmul.f32 %v506, %v586
    %v636 = vmul.f32 %v507, %v586
    %v637 = vmul.f32 %v508, %v586
    %v638 = vmul.f32 %v509, %v586
    %v639 = vmul.f32 %v510, %v586
    %v640 = vmul.f32 %v511, %v586
    %v641 = vmul.f32 %v512, %v586
    %v642 = vmul.f32 %v513, %v586
    %v643 = vmul.f32 %v514, %v586
    %v644 = vmul.f32 %v515, %v586
    %v645 = vmul.f32 %v516, %v586
    %v646 = vmul.f32 %v517, %v586
    %v647 = vmul.f32 %v518, %v586
    %v648 = vmul.f32 %v519, %v586
    %v649 = vmul.f32 %v520, %v586
    %v650 = vmul.f32 %v521, %v586
    %v651 = vmul.f32 %v522, %v586
    %v652 = vmul.f32 %v523, %v586
    %v653 = vmul.f32 %v524, %v586
    %v654 = vmul.f32 %v525, %v586
    %v655 = vmul.f32 %v526, %v586
    %v656 = vmul.f32 %v527, %v586
    %v657 = vmul.f32 %v528, %v586
    %v658 = vmul.f32 %v529, %v586
    %v659 = vmul.f32 %v530, %v586
    %v660 = vmul.f32 %v531, %v586
    %v661 = vmul.f32 %v532, %v586
    %v662 = vmul.f32 %v533, %v586
    %v663 = vmul.f32 %v534, %v586
    %v664 = vmul.f32 %v535, %v586
    %v665 = vmul.f32 %v536, %v586
    %v666 = vmul.f32 %v537, %v586
    %v667 = vmul.f32 %v538, %v586
    %v668 = vmul.f32 %v539, %v586
    %v669 = vmul.f32 %v540, %v586
    %v670 = vmul.f32 %v541, %v586
    %v671 = vmul.f32 %v542, %v586
    %v672 = vmul.f32 %v543, %v586
    %v673 = vmul.f32 %v544, %v586
    %v674 = vmul.f32 %v545, %v586
    %v675 = vmul.f32 %v546, %v586
    %v676 = vmul.f32 %v547, %v586
    %v677 = vmul.f32 %v548, %v586
    %v678 = vmul.f32 %v549, %v586
    %v679 = vmul.f32 %v550, %v586
    %v680 = vmul.f32 %v551, %v586
    %v681 = vmul.f32 %v552, %v586
    %v682 = vmul.f32 %v553, %v586
    %v683 = vmul.f32 %v554, %v586
    %v684 = vmul.f32 %v555, %v586
    %v685 = vmul.f32 %v556, %v586
    %v686 = vmul.f32 %v557, %v586
    %v687 = vmul.f32 %v558, %v586
    %v688 = vmul.f32 %v559, %v586
    %v689 = vmul.f32 %v560, %v586
    %v690 = vmul.f32 %v561, %v586
    %v691 = vmul.f32 %v562, %v586
    %v692 = vmul.f32 %v563, %v586
    %v693 = vmul.f32 %v564, %v586
    %v694 = vmul.f32 %v565, %v586
    %v695 = vmul.f32 %v566, %v586
    %v696 = vmul.f32 %v567, %v586
    %v697 = vmul.f32 %v568, %v586
    %v698 = vmul.f32 %v569, %v586
    %v699 = vmul.f32 %v570, %v586
    %v700 = vmul.f32 %v571, %v586
    %v701 = vmul.f32 %v572, %v586
    %v702 = vmul.f32 %v573, %v586
    %v703 = vmul.f32 %v574, %v586
    %v704 = vmul.f32 %v575, %v586
    %v705 = vmul.f32 %v576, %v586
    %v706 = vmul.f32 %v577, %v586
    %v707 = vmul.f32 %v578, %v586
    %v708 = vmul.f32 %v579, %v586
    %v709 = vmul.f32 %v580, %v586
    %v710 = vmul.f32 %v581, %v586
    %v711 = vmul.f32 %v582, %v586
    %v712 = vmul.f32 %v583, %v586
    %v713 = vmul.f32 %v584, %v586
    %v714 = vmul.f32 %v585, %v586
    %715 = vst [vmem:[#allocation10 + $0x8] sm:$0xff] %v587
    %716 = vst [vmem:[#allocation10 + $0x20] sm:$0xff] %v588
    %717 = vst [vmem:[#allocation10 + $0x38] sm:$0xff] %v589
    %718 = vst [vmem:[#allocation10 + $0x50] sm:$0xff] %v590
    %719 = vst [vmem:[#allocation10 + $0x68] sm:$0xff] %v591
    %720 = vst [vmem:[#allocation10 + $0x80] sm:$0xff] %v592
    %721 = vst [vmem:[#allocation10 + $0x98] sm:$0xff] %v593
    %722 = vst [vmem:[#allocation10 + $0xb0] sm:$0xff] %v594
    %723 = vst [vmem:[#allocation10 + $0xc8] sm:$0xff] %v595
    %724 = vst [vmem:[#allocation10 + $0xe0] sm:$0xff] %v596
    %725 = vst [vmem:[#allocation10 + $0xf8] sm:$0xff] %v597
    %726 = vst [vmem:[#allocation10 + $0x110] sm:$0xff] %v598
    %727 = vst [vmem:[#allocation10 + $0x128] sm:$0xff] %v599
    %728 = vst [vmem:[#allocation10 + $0x140] sm:$0xff] %v600
    %729 = vst [vmem:[#allocation10 + $0x158] sm:$0xff] %v601
    %730 = vst [vmem:[#allocation10 + $0x170] sm:$0xff] %v602
    %731 = vst [vmem:[#allocation10 + $0x188] sm:$0xff] %v603
    %732 = vst [vmem:[#allocation10 + $0x1a0] sm:$0xff] %v604
    %733 = vst [vmem:[#allocation10 + $0x1b8] sm:$0xff] %v605
    %734 = vst [vmem:[#allocation10 + $0x1d0] sm:$0xff] %v606
    %735 = vst [vmem:[#allocation10 + $0x1e8] sm:$0xff] %v607
    %736 = vst [vmem:[#allocation10 + $0x200] sm:$0xff] %v608
    %737 = vst [vmem:[#allocation10 + $0x218] sm:$0xff] %v609
    %738 = vst [vmem:[#allocation10 + $0x230] sm:$0xff] %v610
    %739 = vst [vmem:[#allocation10 + $0x248] sm:$0xff] %v611
    %740 = vst [vmem:[#allocation10 + $0x260] sm:$0xff] %v612
    %741 = vst [vmem:[#allocation10 + $0x278] sm:$0xff] %v613
    %742 = vst [vmem:[#allocation10 + $0x290] sm:$0xff] %v614
    %743 = vst [vmem:[#allocation10 + $0x2a8] sm:$0xff] %v615
    %744 = vst [vmem:[#allocation10 + $0x2c0] sm:$0xff] %v616
    %745 = vst [vmem:[#allocation10 + $0x2d8] sm:$0xff] %v617
    %746 = vst [vmem:[#allocation10 + $0x2f0] sm:$0xff] %v618
    %747 = vst [vmem:[#allocation10 + $0x308] sm:$0xff] %v619
    %748 = vst [vmem:[#allocation10 + $0x320] sm:$0xff] %v620
    %749 = vst [vmem:[#allocation10 + $0x338] sm:$0xff] %v621
    %750 = vst [vmem:[#allocation10 + $0x350] sm:$0xff] %v622
    %751 = vst [vmem:[#allocation10 + $0x368] sm:$0xff] %v623
    %752 = vst [vmem:[#allocation10 + $0x380] sm:$0xff] %v624
    %753 = vst [vmem:[#allocation10 + $0x398] sm:$0xff] %v625
    %754 = vst [vmem:[#allocation10 + $0x3b0] sm:$0xff] %v626
    %755 = vst [vmem:[#allocation10 + $0x3c8] sm:$0xff] %v627
    %756 = vst [vmem:[#allocation10 + $0x3e0] sm:$0xff] %v628
    %757 = vst [vmem:[#allocation10 + $0x3f8] sm:$0xff] %v629
    %758 = vst [vmem:[#allocation10 + $0x410] sm:$0xff] %v630
    %759 = vst [vmem:[#allocation10 + $0x428] sm:$0xff] %v631
    %760 = vst [vmem:[#allocation10 + $0x440] sm:$0xff] %v632
    %761 = vst [vmem:[#allocation10 + $0x458] sm:$0xff] %v633
    %762 = vst [vmem:[#allocation10 + $0x470] sm:$0xff] %v634
    %763 = vst [vmem:[#allocation10 + $0x488] sm:$0xff] %v635
    %764 = vst [vmem:[#allocation10 + $0x4a0] sm:$0xff] %v636
    %765 = vst [vmem:[#allocation10 + $0x4b8] sm:$0xff] %v637
    %766 = vst [vmem:[#allocation10 + $0x4d0] sm:$0xff] %v638
    %767 = vst [vmem:[#allocation10 + $0x4e8] sm:$0xff] %v639
    %768 = vst [vmem:[#allocation10 + $0x500] sm:$0xff] %v640
    %769 = vst [vmem:[#allocation10 + $0x518] sm:$0xff] %v641
    %770 = vst [vmem:[#allocation10 + $0x530] sm:$0xff] %v642
    %771 = vst [vmem:[#allocation10 + $0x548] sm:$0xff] %v643
    %772 = vst [vmem:[#allocation10 + $0x560] sm:$0xff] %v644
    %773 = vst [vmem:[#allocation10 + $0x578] sm:$0xff] %v645
    %774 = vst [vmem:[#allocation10 + $0x590] sm:$0xff] %v646
    %775 = vst [vmem:[#allocation10 + $0x5a8] sm:$0xff] %v647
    %776 = vst [vmem:[#allocation10 + $0x5c0] sm:$0xff] %v648
    %777 = vst [vmem:[#allocation10 + $0x5d8] sm:$0xff] %v649
    %778 = vst [vmem:[#allocation10 + $0x5f0] sm:$0xff] %v650
    %779 = vst [vmem:[#allocation10 + $0x608] sm:$0xff] %v651
    %780 = vst [vmem:[#allocation10 + $0x620] sm:$0xff] %v652
    %781 = vst [vmem:[#allocation10 + $0x638] sm:$0xff] %v653
    %782 = vst [vmem:[#allocation10 + $0x650] sm:$0xff] %v654
    %783 = vst [vmem:[#allocation10 + $0x668] sm:$0xff] %v655
    %784 = vst [vmem:[#allocation10 + $0x680] sm:$0xff] %v656
    %785 = vst [vmem:[#allocation10 + $0x698] sm:$0xff] %v657
    %786 = vst [vmem:[#allocation10 + $0x6b0] sm:$0xff] %v658
    %787 = vst [vmem:[#allocation10 + $0x6c8] sm:$0xff] %v659
    %788 = vst [vmem:[#allocation10 + $0x6e0] sm:$0xff] %v660
    %789 = vst [vmem:[#allocation10 + $0x6f8] sm:$0xff] %v661
    %790 = vst [vmem:[#allocation10 + $0x710] sm:$0xff] %v662
    %791 = vst [vmem:[#allocation10 + $0x728] sm:$0xff] %v663
    %792 = vst [vmem:[#allocation10 + $0x740] sm:$0xff] %v664
    %793 = vst [vmem:[#allocation10 + $0x758] sm:$0xff] %v665
    %794 = vst [vmem:[#allocation10 + $0x770] sm:$0xff] %v666
    %795 = vst [vmem:[#allocation10 + $0x788] sm:$0xff] %v667
    %796 = vst [vmem:[#allocation10 + $0x7a0] sm:$0xff] %v668
    %797 = vst [vmem:[#allocation10 + $0x7b8] sm:$0xff] %v669
    %798 = vst [vmem:[#allocation10 + $0x7d0] sm:$0xff] %v670
    %799 = vst [vmem:[#allocation10 + $0x7e8] sm:$0xff] %v671
    %800 = vst [vmem:[#allocation10 + $0x800] sm:$0xff] %v672
    %801 = vst [vmem:[#allocation10 + $0x818] sm:$0xff] %v673
    %802 = vst [vmem:[#allocation10 + $0x830] sm:$0xff] %v674
    %803 = vst [vmem:[#allocation10 + $0x848] sm:$0xff] %v675
    %804 = vst [vmem:[#allocation10 + $0x860] sm:$0xff] %v676
    %805 = vst [vmem:[#allocation10 + $0x878] sm:$0xff] %v677
    %806 = vst [vmem:[#allocation10 + $0x890] sm:$0xff] %v678
    %807 = vst [vmem:[#allocation10 + $0x8a8] sm:$0xff] %v679
    %808 = vst [vmem:[#allocation10 + $0x8c0] sm:$0xff] %v680
    %809 = vst [vmem:[#allocation10 + $0x8d8] sm:$0xff] %v681
    %810 = vst [vmem:[#allocation10 + $0x8f0] sm:$0xff] %v682
    %811 = vst [vmem:[#allocation10 + $0x908] sm:$0xff] %v683
    %812 = vst [vmem:[#allocation10 + $0x920] sm:$0xff] %v684
    %813 = vst [vmem:[#allocation10 + $0x938] sm:$0xff] %v685
    %814 = vst [vmem:[#allocation10 + $0x950] sm:$0xff] %v686
    %815 = vst [vmem:[#allocation10 + $0x968] sm:$0xff] %v687
    %816 = vst [vmem:[#allocation10 + $0x980] sm:$0xff] %v688
    %817 = vst [vmem:[#allocation10 + $0x998] sm:$0xff] %v689
    %818 = vst [vmem:[#allocation10 + $0x9b0] sm:$0xff] %v690
    %819 = vst [vmem:[#allocation10 + $0x9c8] sm:$0xff] %v691
    %820 = vst [vmem:[#allocation10 + $0x9e0] sm:$0xff] %v692
    %821 = vst [vmem:[#allocation10 + $0x9f8] sm:$0xff] %v693
    %822 = vst [vmem:[#allocation10 + $0xa10] sm:$0xff] %v694
    %823 = vst [vmem:[#allocation10 + $0xa28] sm:$0xff] %v695
    %824 = vst [vmem:[#allocation10 + $0xa40] sm:$0xff] %v696
    %825 = vst [vmem:[#allocation10 + $0xa58] sm:$0xff] %v697
    %826 = vst [vmem:[#allocation10 + $0xa70] sm:$0xff] %v698
    %827 = vst [vmem:[#allocation10 + $0xa88] sm:$0xff] %v699
    %828 = vst [vmem:[#allocation10 + $0xaa0] sm:$0xff] %v700
    %829 = vst [vmem:[#allocation10 + $0xab8] sm:$0xff] %v701
    %830 = vst [vmem:[#allocation10 + $0xad0] sm:$0xff] %v702
    %831 = vst [vmem:[#allocation10 + $0xae8] sm:$0xff] %v703
    %832 = vst [vmem:[#allocation10 + $0xb00] sm:$0xff] %v704
    %833 = vst [vmem:[#allocation10 + $0xb18] sm:$0xff] %v705
    %834 = vst [vmem:[#allocation10 + $0xb30] sm:$0xff] %v706
    %835 = vst [vmem:[#allocation10 + $0xb48] sm:$0xff] %v707
    %836 = vst [vmem:[#allocation10 + $0xb60] sm:$0xff] %v708
    %837 = vst [vmem:[#allocation10 + $0xb78] sm:$0xff] %v709
    %838 = vst [vmem:[#allocation10 + $0xb90] sm:$0xff] %v710
    %839 = vst [vmem:[#allocation10 + $0xba8] sm:$0xff] %v711
    %840 = vst [vmem:[#allocation10 + $0xbc0] sm:$0xff] %v712
    %841 = vst [vmem:[#allocation10 + $0xbd8] sm:$0xff] %v713
    %842 = vst [vmem:[#allocation10 + $0xbf0] sm:$0xff] %v714
    %v843 = vld [vmem:[#allocation9] sm:$0xff]
    %v844 = vld [vmem:[#allocation9 + $0x8] sm:$0xff]
    %v845 = vld [vmem:[#allocation9 + $0x10] sm:$0xff]
    %v846 = vld [vmem:[#allocation9 + $0x18] sm:$0xff]
    %v847 = vld [vmem:[#allocation9 + $0x20] sm:$0xff]
    %v848 = vld [vmem:[#allocation9 + $0x28] sm:$0xff]
    %v849 = vld [vmem:[#allocation9 + $0x30] sm:$0xff]
    %v850 = vld [vmem:[#allocation9 + $0x38] sm:$0xff]
    %v851 = vld [vmem:[#allocation9 + $0x40] sm:$0xff]
    %v852 = vld [vmem:[#allocation9 + $0x48] sm:$0xff]
    %v853 = vld [vmem:[#allocation9 + $0x50] sm:$0xff]
    %v854 = vld [vmem:[#allocation9 + $0x58] sm:$0xff]
    %v855 = vld [vmem:[#allocation9 + $0x60] sm:$0xff]
    %v856 = vld [vmem:[#allocation9 + $0x68] sm:$0xff]
    %v857 = vld [vmem:[#allocation9 + $0x70] sm:$0xff]
    %v858 = vld [vmem:[#allocation9 + $0x78] sm:$0xff]
    %v859 = vld [vmem:[#allocation9 + $0x80] sm:$0xff]
    %v860 = vld [vmem:[#allocation9 + $0x88] sm:$0xff]
    %v861 = vld [vmem:[#allocation9 + $0x90] sm:$0xff]
    %v862 = vld [vmem:[#allocation9 + $0x98] sm:$0xff]
    %v863 = vld [vmem:[#allocation9 + $0xa0] sm:$0xff]
    %v864 = vld [vmem:[#allocation9 + $0xa8] sm:$0xff]
    %v865 = vld [vmem:[#allocation9 + $0xb0] sm:$0xff]
    %v866 = vld [vmem:[#allocation9 + $0xb8] sm:$0xff]
    %v867 = vld [vmem:[#allocation9 + $0xc0] sm:$0xff]
    %v868 = vld [vmem:[#allocation9 + $0xc8] sm:$0xff]
    %v869 = vld [vmem:[#allocation9 + $0xd0] sm:$0xff]
    %v870 = vld [vmem:[#allocation9 + $0xd8] sm:$0xff]
    %v871 = vld [vmem:[#allocation9 + $0xe0] sm:$0xff]
    %v872 = vld [vmem:[#allocation9 + $0xe8] sm:$0xff]
    %v873 = vld [vmem:[#allocation9 + $0xf0] sm:$0xff]
    %v874 = vld [vmem:[#allocation9 + $0xf8] sm:$0xff]
    %v875 = vld [vmem:[#allocation9 + $0x100] sm:$0xff]
    %v876 = vld [vmem:[#allocation9 + $0x108] sm:$0xff]
    %v877 = vld [vmem:[#allocation9 + $0x110] sm:$0xff]
    %v878 = vld [vmem:[#allocation9 + $0x118] sm:$0xff]
    %v879 = vld [vmem:[#allocation9 + $0x120] sm:$0xff]
    %v880 = vld [vmem:[#allocation9 + $0x128] sm:$0xff]
    %v881 = vld [vmem:[#allocation9 + $0x130] sm:$0xff]
    %v882 = vld [vmem:[#allocation9 + $0x138] sm:$0xff]
    %v883 = vld [vmem:[#allocation9 + $0x140] sm:$0xff]
    %v884 = vld [vmem:[#allocation9 + $0x148] sm:$0xff]
    %v885 = vld [vmem:[#allocation9 + $0x150] sm:$0xff]
    %v886 = vld [vmem:[#allocation9 + $0x158] sm:$0xff]
    %v887 = vld [vmem:[#allocation9 + $0x160] sm:$0xff]
    %v888 = vld [vmem:[#allocation9 + $0x168] sm:$0xff]
    %v889 = vld [vmem:[#allocation9 + $0x170] sm:$0xff]
    %v890 = vld [vmem:[#allocation9 + $0x178] sm:$0xff]
    %v891 = vld [vmem:[#allocation9 + $0x180] sm:$0xff]
    %v892 = vld [vmem:[#allocation9 + $0x188] sm:$0xff]
    %v893 = vld [vmem:[#allocation9 + $0x190] sm:$0xff]
    %v894 = vld [vmem:[#allocation9 + $0x198] sm:$0xff]
    %v895 = vld [vmem:[#allocation9 + $0x1a0] sm:$0xff]
    %v896 = vld [vmem:[#allocation9 + $0x1a8] sm:$0xff]
    %v897 = vld [vmem:[#allocation9 + $0x1b0] sm:$0xff]
    %v898 = vld [vmem:[#allocation9 + $0x1b8] sm:$0xff]
    %v899 = vld [vmem:[#allocation9 + $0x1c0] sm:$0xff]
    %v900 = vld [vmem:[#allocation9 + $0x1c8] sm:$0xff]
    %v901 = vld [vmem:[#allocation9 + $0x1d0] sm:$0xff]
    %v902 = vld [vmem:[#allocation9 + $0x1d8] sm:$0xff]
    %v903 = vld [vmem:[#allocation9 + $0x1e0] sm:$0xff]
    %v904 = vld [vmem:[#allocation9 + $0x1e8] sm:$0xff]
    %v905 = vld [vmem:[#allocation9 + $0x1f0] sm:$0xff]
    %v906 = vld [vmem:[#allocation9 + $0x1f8] sm:$0xff]
    %v907 = vld [vmem:[#allocation9 + $0x200] sm:$0xff]
    %v908 = vld [vmem:[#allocation9 + $0x208] sm:$0xff]
    %v909 = vld [vmem:[#allocation9 + $0x210] sm:$0xff]
    %v910 = vld [vmem:[#allocation9 + $0x218] sm:$0xff]
    %v911 = vld [vmem:[#allocation9 + $0x220] sm:$0xff]
    %v912 = vld [vmem:[#allocation9 + $0x228] sm:$0xff]
    %v913 = vld [vmem:[#allocation9 + $0x230] sm:$0xff]
    %v914 = vld [vmem:[#allocation9 + $0x238] sm:$0xff]
    %v915 = vld [vmem:[#allocation9 + $0x240] sm:$0xff]
    %v916 = vld [vmem:[#allocation9 + $0x248] sm:$0xff]
    %v917 = vld [vmem:[#allocation9 + $0x250] sm:$0xff]
    %v918 = vld [vmem:[#allocation9 + $0x258] sm:$0xff]
    %v919 = vld [vmem:[#allocation9 + $0x260] sm:$0xff]
    %v920 = vld [vmem:[#allocation9 + $0x268] sm:$0xff]
    %v921 = vld [vmem:[#allocation9 + $0x270] sm:$0xff]
    %v922 = vld [vmem:[#allocation9 + $0x278] sm:$0xff]
    %v923 = vld [vmem:[#allocation9 + $0x280] sm:$0xff]
    %v924 = vld [vmem:[#allocation9 + $0x288] sm:$0xff]
    %v925 = vld [vmem:[#allocation9 + $0x290] sm:$0xff]
    %v926 = vld [vmem:[#allocation9 + $0x298] sm:$0xff]
    %v927 = vld [vmem:[#allocation9 + $0x2a0] sm:$0xff]
    %v928 = vld [vmem:[#allocation9 + $0x2a8] sm:$0xff]
    %v929 = vld [vmem:[#allocation9 + $0x2b0] sm:$0xff]
    %v930 = vld [vmem:[#allocation9 + $0x2b8] sm:$0xff]
    %v931 = vld [vmem:[#allocation9 + $0x2c0] sm:$0xff]
    %v932 = vld [vmem:[#allocation9 + $0x2c8] sm:$0xff]
    %v933 = vld [vmem:[#allocation9 + $0x2d0] sm:$0xff]
    %v934 = vld [vmem:[#allocation9 + $0x2d8] sm:$0xff]
    %v935 = vld [vmem:[#allocation9 + $0x2e0] sm:$0xff]
    %v936 = vld [vmem:[#allocation9 + $0x2e8] sm:$0xff]
    %v937 = vld [vmem:[#allocation9 + $0x2f0] sm:$0xff]
    %v938 = vld [vmem:[#allocation9 + $0x2f8] sm:$0xff]
    %v939 = vld [vmem:[#allocation9 + $0x300] sm:$0xff]
    %v940 = vld [vmem:[#allocation9 + $0x308] sm:$0xff]
    %v941 = vld [vmem:[#allocation9 + $0x310] sm:$0xff]
    %v942 = vld [vmem:[#allocation9 + $0x318] sm:$0xff]
    %v943 = vld [vmem:[#allocation9 + $0x320] sm:$0xff]
    %v944 = vld [vmem:[#allocation9 + $0x328] sm:$0xff]
    %v945 = vld [vmem:[#allocation9 + $0x330] sm:$0xff]
    %v946 = vld [vmem:[#allocation9 + $0x338] sm:$0xff]
    %v947 = vld [vmem:[#allocation9 + $0x340] sm:$0xff]
    %v948 = vld [vmem:[#allocation9 + $0x348] sm:$0xff]
    %v949 = vld [vmem:[#allocation9 + $0x350] sm:$0xff]
    %v950 = vld [vmem:[#allocation9 + $0x358] sm:$0xff]
    %v951 = vld [vmem:[#allocation9 + $0x360] sm:$0xff]
    %v952 = vld [vmem:[#allocation9 + $0x368] sm:$0xff]
    %v953 = vld [vmem:[#allocation9 + $0x370] sm:$0xff]
    %v954 = vld [vmem:[#allocation9 + $0x378] sm:$0xff]
    %v955 = vld [vmem:[#allocation9 + $0x380] sm:$0xff]
    %v956 = vld [vmem:[#allocation9 + $0x388] sm:$0xff]
    %v957 = vld [vmem:[#allocation9 + $0x390] sm:$0xff]
    %v958 = vld [vmem:[#allocation9 + $0x398] sm:$0xff]
    %v959 = vld [vmem:[#allocation9 + $0x3a0] sm:$0xff]
    %v960 = vld [vmem:[#allocation9 + $0x3a8] sm:$0xff]
    %v961 = vld [vmem:[#allocation9 + $0x3b0] sm:$0xff]
    %v962 = vld [vmem:[#allocation9 + $0x3b8] sm:$0xff]
    %v963 = vld [vmem:[#allocation9 + $0x3c0] sm:$0xff]
    %v964 = vld [vmem:[#allocation9 + $0x3c8] sm:$0xff]
    %v965 = vld [vmem:[#allocation9 + $0x3d0] sm:$0xff]
    %v966 = vld [vmem:[#allocation9 + $0x3d8] sm:$0xff]
    %v967 = vld [vmem:[#allocation9 + $0x3e0] sm:$0xff]
    %v968 = vld [vmem:[#allocation9 + $0x3e8] sm:$0xff]
    %v969 = vld [vmem:[#allocation9 + $0x3f0] sm:$0xff]
    %v970 = vld [vmem:[#allocation9 + $0x3f8] sm:$0xff]
    %v971 = vstv %s72
    %v972 = vmul.f32 %v843, %v971
    %v973 = vmul.f32 %v844, %v971
    %v974 = vmul.f32 %v845, %v971
    %v975 = vmul.f32 %v846, %v971
    %v976 = vmul.f32 %v847, %v971
    %v977 = vmul.f32 %v848, %v971
    %v978 = vmul.f32 %v849, %v971
    %v979 = vmul.f32 %v850, %v971
    %v980 = vmul.f32 %v851, %v971
    %v981 = vmul.f32 %v852, %v971
    %v982 = vmul.f32 %v853, %v971
    %v983 = vmul.f32 %v854, %v971
    %v984 = vmul.f32 %v855, %v971
    %v985 = vmul.f32 %v856, %v971
    %v986 = vmul.f32 %v857, %v971
    %v987 = vmul.f32 %v858, %v971
    %v988 = vmul.f32 %v859, %v971
    %v989 = vmul.f32 %v860, %v971
    %v990 = vmul.f32 %v861, %v971
    %v991 = vmul.f32 %v862, %v971
    %v992 = vmul.f32 %v863, %v971
    %v993 = vmul.f32 %v864, %v971
    %v994 = vmul.f32 %v865, %v971
    %v995 = vmul.f32 %v866, %v971
    %v996 = vmul.f32 %v867, %v971
    %v997 = vmul.f32 %v868, %v971
    %v998 = vmul.f32 %v869, %v971
    %v999 = vmul.f32 %v870, %v971
    %v1000 = vmul.f32 %v871, %v971
    %v1001 = vmul.f32 %v872, %v971
    %v1002 = vmul.f32 %v873, %v971
    %v1003 = vmul.f32 %v874, %v971
    %v1004 = vmul.f32 %v875, %v971
    %v1005 = vmul.f32 %v876, %v971
    %v1006 = vmul.f32 %v877, %v971
    %v1007 = vmul.f32 %v878, %v971
    %v1008 = vmul.f32 %v879, %v971
    %v1009 = vmul.f32 %v880, %v971
    %v1010 = vmul.f32 %v881, %v971
    %v1011 = vmul.f32 %v882, %v971
    %v1012 = vmul.f32 %v883, %v971
    %v1013 = vmul.f32 %v884, %v971
    %v1014 = vmul.f32 %v885, %v971
    %v1015 = vmul.f32 %v886, %v971
    %v1016 = vmul.f32 %v887, %v971
    %v1017 = vmul.f32 %v888, %v971
    %v1018 = vmul.f32 %v889, %v971
    %v1019 = vmul.f32 %v890, %v971
    %v1020 = vmul.f32 %v891, %v971
    %v1021 = vmul.f32 %v892, %v971
    %v1022 = vmul.f32 %v893, %v971
    %v1023 = vmul.f32 %v894, %v971
    %v1024 = vmul.f32 %v895, %v971
    %v1025 = vmul.f32 %v896, %v971
    %v1026 = vmul.f32 %v897, %v971
    %v1027 = vmul.f32 %v898, %v971
    %v1028 = vmul.f32 %v899, %v971
    %v1029 = vmul.f32 %v900, %v971
    %v1030 = vmul.f32 %v901, %v971
    %v1031 = vmul.f32 %v902, %v971
    %v1032 = vmul.f32 %v903, %v971
    %v1033 = vmul.f32 %v904, %v971
    %v1034 = vmul.f32 %v905, %v971
    %v1035 = vmul.f32 %v906, %v971
    %v1036 = vmul.f32 %v907, %v971
    %v1037 = vmul.f32 %v908, %v971
    %v1038 = vmul.f32 %v909, %v971
    %v1039 = vmul.f32 %v910, %v971
    %v1040 = vmul.f32 %v911, %v971
    %v1041 = vmul.f32 %v912, %v971
    %v1042 = vmul.f32 %v913, %v971
    %v1043 = vmul.f32 %v914, %v971
    %v1044 = vmul.f32 %v915, %v971
    %v1045 = vmul.f32 %v916, %v971
    %v1046 = vmul.f32 %v917, %v971
    %v1047 = vmul.f32 %v918, %v971
    %v1048 = vmul.f32 %v919, %v971
    %v1049 = vmul.f32 %v920, %v971
    %v1050 = vmul.f32 %v921, %v971
    %v1051 = vmul.f32 %v922, %v971
    %v1052 = vmul.f32 %v923, %v971
    %v1053 = vmul.f32 %v924, %v971
    %v1054 = vmul.f32 %v925, %v971
    %v1055 = vmul.f32 %v926, %v971
    %v1056 = vmul.f32 %v927, %v971
    %v1057 = vmul.f32 %v928, %v971
    %v1058 = vmul.f32 %v929, %v971
    %v1059 = vmul.f32 %v930, %v971
    %v1060 = vmul.f32 %v931, %v971
    %v1061 = vmul.f32 %v932, %v971
    %v1062 = vmul.f32 %v933, %v971
    %v1063 = vmul.f32 %v934, %v971
    %v1064 = vmul.f32 %v935, %v971
    %v1065 = vmul.f32 %v936, %v971
    %v1066 = vmul.f32 %v937, %v971
    %v1067 = vmul.f32 %v938, %v971
    %v1068 = vmul.f32 %v939, %v971
    %v1069 = vmul.f32 %v940, %v971
    %v1070 = vmul.f32 %v941, %v971
    %v1071 = vmul.f32 %v942, %v971
    %v1072 = vmul.f32 %v943, %v971
    %v1073 = vmul.f32 %v944, %v971
    %v1074 = vmul.f32 %v945, %v971
    %v1075 = vmul.f32 %v946, %v971
    %v1076 = vmul.f32 %v947, %v971
    %v1077 = vmul.f32 %v948, %v971
    %v1078 = vmul.f32 %v949, %v971
    %v1079 = vmul.f32 %v950, %v971
    %v1080 = vmul.f32 %v951, %v971
    %v1081 = vmul.f32 %v952, %v971
    %v1082 = vmul.f32 %v953, %v971
    %v1083 = vmul.f32 %v954, %v971
    %v1084 = vmul.f32 %v955, %v971
    %v1085 = vmul.f32 %v956, %v971
    %v1086 = vmul.f32 %v957, %v971
    %v1087 = vmul.f32 %v958, %v971
    %v1088 = vmul.f32 %v959, %v971
    %v1089 = vmul.f32 %v960, %v971
    %v1090 = vmul.f32 %v961, %v971
    %v1091 = vmul.f32 %v962, %v971
    %v1092 = vmul.f32 %v963, %v971
    %v1093 = vmul.f32 %v964, %v971
    %v1094 = vmul.f32 %v965, %v971
    %v1095 = vmul.f32 %v966, %v971
    %v1096 = vmul.f32 %v967, %v971
    %v1097 = vmul.f32 %v968, %v971
    %v1098 = vmul.f32 %v969, %v971
    %v1099 = vmul.f32 %v970, %v971
    %1100 = vst [vmem:[#allocation10 + $0x10] sm:$0xff] %v972
    %1101 = vst [vmem:[#allocation10 + $0x28] sm:$0xff] %v973
    %1102 = vst [vmem:[#allocation10 + $0x40] sm:$0xff] %v974
    %1103 = vst [vmem:[#allocation10 + $0x58] sm:$0xff] %v975
    %1104 = vst [vmem:[#allocation10 + $0x70] sm:$0xff] %v976
    %1105 = vst [vmem:[#allocation10 + $0x88] sm:$0xff] %v977
    %1106 = vst [vmem:[#allocation10 + $0xa0] sm:$0xff] %v978
    %1107 = vst [vmem:[#allocation10 + $0xb8] sm:$0xff] %v979
    %1108 = vst [vmem:[#allocation10 + $0xd0] sm:$0xff] %v980
    %1109 = vst [vmem:[#allocation10 + $0xe8] sm:$0xff] %v981
    %1110 = vst [vmem:[#allocation10 + $0x100] sm:$0xff] %v982
    %1111 = vst [vmem:[#allocation10 + $0x118] sm:$0xff] %v983
    %1112 = vst [vmem:[#allocation10 + $0x130] sm:$0xff] %v984
    %1113 = vst [vmem:[#allocation10 + $0x148] sm:$0xff] %v985
    %1114 = vst [vmem:[#allocation10 + $0x160] sm:$0xff] %v986
    %1115 = vst [vmem:[#allocation10 + $0x178] sm:$0xff] %v987
    %1116 = vst [vmem:[#allocation10 + $0x190] sm:$0xff] %v988
    %1117 = vst [vmem:[#allocation10 + $0x1a8] sm:$0xff] %v989
    %1118 = vst [vmem:[#allocation10 + $0x1c0] sm:$0xff] %v990
    %1119 = vst [vmem:[#allocation10 + $0x1d8] sm:$0xff] %v991
    %1120 = vst [vmem:[#allocation10 + $0x1f0] sm:$0xff] %v992
    %1121 = vst [vmem:[#allocation10 + $0x208] sm:$0xff] %v993
    %1122 = vst [vmem:[#allocation10 + $0x220] sm:$0xff] %v994
    %1123 = vst [vmem:[#allocation10 + $0x238] sm:$0xff] %v995
    %1124 = vst [vmem:[#allocation10 + $0x250] sm:$0xff] %v996
    %1125 = vst [vmem:[#allocation10 + $0x268] sm:$0xff] %v997
    %1126 = vst [vmem:[#allocation10 + $0x280] sm:$0xff] %v998
    %1127 = vst [vmem:[#allocation10 + $0x298] sm:$0xff] %v999
    %1128 = vst [vmem:[#allocation10 + $0x2b0] sm:$0xff] %v1000
    %1129 = vst [vmem:[#allocation10 + $0x2c8] sm:$0xff] %v1001
    %1130 = vst [vmem:[#allocation10 + $0x2e0] sm:$0xff] %v1002
    %1131 = vst [vmem:[#allocation10 + $0x2f8] sm:$0xff] %v1003
    %1132 = vst [vmem:[#allocation10 + $0x310] sm:$0xff] %v1004
    %1133 = vst [vmem:[#allocation10 + $0x328] sm:$0xff] %v1005
    %1134 = vst [vmem:[#allocation10 + $0x340] sm:$0xff] %v1006
    %1135 = vst [vmem:[#allocation10 + $0x358] sm:$0xff] %v1007
    %1136 = vst [vmem:[#allocation10 + $0x370] sm:$0xff] %v1008
    %1137 = vst [vmem:[#allocation10 + $0x388] sm:$0xff] %v1009
    %1138 = vst [vmem:[#allocation10 + $0x3a0] sm:$0xff] %v1010
    %1139 = vst [vmem:[#allocation10 + $0x3b8] sm:$0xff] %v1011
    %1140 = vst [vmem:[#allocation10 + $0x3d0] sm:$0xff] %v1012
    %1141 = vst [vmem:[#allocation10 + $0x3e8] sm:$0xff] %v1013
    %1142 = vst [vmem:[#allocation10 + $0x400] sm:$0xff] %v1014
    %1143 = vst [vmem:[#allocation10 + $0x418] sm:$0xff] %v1015
    %1144 = vst [vmem:[#allocation10 + $0x430] sm:$0xff] %v1016
    %1145 = vst [vmem:[#allocation10 + $0x448] sm:$0xff] %v1017
    %1146 = vst [vmem:[#allocation10 + $0x460] sm:$0xff] %v1018
    %1147 = vst [vmem:[#allocation10 + $0x478] sm:$0xff] %v1019
    %1148 = vst [vmem:[#allocation10 + $0x490] sm:$0xff] %v1020
    %1149 = vst [vmem:[#allocation10 + $0x4a8] sm:$0xff] %v1021
    %1150 = vst [vmem:[#allocation10 + $0x4c0] sm:$0xff] %v1022
    %1151 = vst [vmem:[#allocation10 + $0x4d8] sm:$0xff] %v1023
    %1152 = vst [vmem:[#allocation10 + $0x4f0] sm:$0xff] %v1024
    %1153 = vst [vmem:[#allocation10 + $0x508] sm:$0xff] %v1025
    %1154 = vst [vmem:[#allocation10 + $0x520] sm:$0xff] %v1026
    %1155 = vst [vmem:[#allocation10 + $0x538] sm:$0xff] %v1027
    %1156 = vst [vmem:[#allocation10 + $0x550] sm:$0xff] %v1028
    %1157 = vst [vmem:[#allocation10 + $0x568] sm:$0xff] %v1029
    %1158 = vst [vmem:[#allocation10 + $0x580] sm:$0xff] %v1030
    %1159 = vst [vmem:[#allocation10 + $0x598] sm:$0xff] %v1031
    %1160 = vst [vmem:[#allocation10 + $0x5b0] sm:$0xff] %v1032
    %1161 = vst [vmem:[#allocation10 + $0x5c8] sm:$0xff] %v1033
    %1162 = vst [vmem:[#allocation10 + $0x5e0] sm:$0xff] %v1034
    %1163 = vst [vmem:[#allocation10 + $0x5f8] sm:$0xff] %v1035
    %1164 = vst [vmem:[#allocation10 + $0x610] sm:$0xff] %v1036
    %1165 = vst [vmem:[#allocation10 + $0x628] sm:$0xff] %v1037
    %1166 = vst [vmem:[#allocation10 + $0x640] sm:$0xff] %v1038
    %1167 = vst [vmem:[#allocation10 + $0x658] sm:$0xff] %v1039
    %1168 = vst [vmem:[#allocation10 + $0x670] sm:$0xff] %v1040
    %1169 = vst [vmem:[#allocation10 + $0x688] sm:$0xff] %v1041
    %1170 = vst [vmem:[#allocation10 + $0x6a0] sm:$0xff] %v1042
    %1171 = vst [vmem:[#allocation10 + $0x6b8] sm:$0xff] %v1043
    %1172 = vst [vmem:[#allocation10 + $0x6d0] sm:$0xff] %v1044
    %1173 = vst [vmem:[#allocation10 + $0x6e8] sm:$0xff] %v1045
    %1174 = vst [vmem:[#allocation10 + $0x700] sm:$0xff] %v1046
    %1175 = vst [vmem:[#allocation10 + $0x718] sm:$0xff] %v1047
    %1176 = vst [vmem:[#allocation10 + $0x730] sm:$0xff] %v1048
    %1177 = vst [vmem:[#allocation10 + $0x748] sm:$0xff] %v1049
    %1178 = vst [vmem:[#allocation10 + $0x760] sm:$0xff] %v1050
    %1179 = vst [vmem:[#allocation10 + $0x778] sm:$0xff] %v1051
    %1180 = vst [vmem:[#allocation10 + $0x790] sm:$0xff] %v1052
    %1181 = vst [vmem:[#allocation10 + $0x7a8] sm:$0xff] %v1053
    %1182 = vst [vmem:[#allocation10 + $0x7c0] sm:$0xff] %v1054
    %1183 = vst [vmem:[#allocation10 + $0x7d8] sm:$0xff] %v1055
    %1184 = vst [vmem:[#allocation10 + $0x7f0] sm:$0xff] %v1056
    %1185 = vst [vmem:[#allocation10 + $0x808] sm:$0xff] %v1057
    %1186 = vst [vmem:[#allocation10 + $0x820] sm:$0xff] %v1058
    %1187 = vst [vmem:[#allocation10 + $0x838] sm:$0xff] %v1059
    %1188 = vst [vmem:[#allocation10 + $0x850] sm:$0xff] %v1060
    %1189 = vst [vmem:[#allocation10 + $0x868] sm:$0xff] %v1061
    %1190 = vst [vmem:[#allocation10 + $0x880] sm:$0xff] %v1062
    %1191 = vst [vmem:[#allocation10 + $0x898] sm:$0xff] %v1063
    %1192 = vst [vmem:[#allocation10 + $0x8b0] sm:$0xff] %v1064
    %1193 = vst [vmem:[#allocation10 + $0x8c8] sm:$0xff] %v1065
    %1194 = vst [vmem:[#allocation10 + $0x8e0] sm:$0xff] %v1066
    %1195 = vst [vmem:[#allocation10 + $0x8f8] sm:$0xff] %v1067
    %1196 = vst [vmem:[#allocation10 + $0x910] sm:$0xff] %v1068
    %1197 = vst [vmem:[#allocation10 + $0x928] sm:$0xff] %v1069
    %1198 = vst [vmem:[#allocation10 + $0x940] sm:$0xff] %v1070
    %1199 = vst [vmem:[#allocation10 + $0x958] sm:$0xff] %v1071
    %1200 = vst [vmem:[#allocation10 + $0x970] sm:$0xff] %v1072
    %1201 = vst [vmem:[#allocation10 + $0x988] sm:$0xff] %v1073
    %1202 = vst [vmem:[#allocation10 + $0x9a0] sm:$0xff] %v1074
    %1203 = vst [vmem:[#allocation10 + $0x9b8] sm:$0xff] %v1075
    %1204 = vst [vmem:[#allocation10 + $0x9d0] sm:$0xff] %v1076
    %1205 = vst [vmem:[#allocation10 + $0x9e8] sm:$0xff] %v1077
    %1206 = vst [vmem:[#allocation10 + $0xa00] sm:$0xff] %v1078
    %1207 = vst [vmem:[#allocation10 + $0xa18] sm:$0xff] %v1079
    %1208 = vst [vmem:[#allocation10 + $0xa30] sm:$0xff] %v1080
    %1209 = vst [vmem:[#allocation10 + $0xa48] sm:$0xff] %v1081
    %1210 = vst [vmem:[#allocation10 + $0xa60] sm:$0xff] %v1082
    %1211 = vst [vmem:[#allocation10 + $0xa78] sm:$0xff] %v1083
    %1212 = vst [vmem:[#allocation10 + $0xa90] sm:$0xff] %v1084
    %1213 = vst [vmem:[#allocation10 + $0xaa8] sm:$0xff] %v1085
    %1214 = vst [vmem:[#allocation10 + $0xac0] sm:$0xff] %v1086
    %1215 = vst [vmem:[#allocation10 + $0xad8] sm:$0xff] %v1087
    %1216 = vst [vmem:[#allocation10 + $0xaf0] sm:$0xff] %v1088
    %1217 = vst [vmem:[#allocation10 + $0xb08] sm:$0xff] %v1089
    %1218 = vst [vmem:[#allocation10 + $0xb20] sm:$0xff] %v1090
    %1219 = vst [vmem:[#allocation10 + $0xb38] sm:$0xff] %v1091
    %1220 = vst [vmem:[#allocation10 + $0xb50] sm:$0xff] %v1092
    %1221 = vst [vmem:[#allocation10 + $0xb68] sm:$0xff] %v1093
    %1222 = vst [vmem:[#allocation10 + $0xb80] sm:$0xff] %v1094
    %1223 = vst [vmem:[#allocation10 + $0xb98] sm:$0xff] %v1095
    %1224 = vst [vmem:[#allocation10 + $0xbb0] sm:$0xff] %v1096
    %1225 = vst [vmem:[#allocation10 + $0xbc8] sm:$0xff] %v1097
    %1226 = vst [vmem:[#allocation10 + $0xbe0] sm:$0xff] %v1098
    %1227 = vst [vmem:[#allocation10 + $0xbf8] sm:$0xff] %v1099
    // Predicated region
    $region34: #{tpu_custom_call.1} parent=1 // pred_check
      _
    $region35: #{tpu_custom_call.1} parent=1 // pred_check_branch
      %1229 = sbr.rel (0) target = $region37
    $region36: #{tpu_custom_call.1} parent=1 // pred_region
      %s1231 = ssub.s32 49152, 49152
      %1232 = vsyncadd [#allocation4], %s1231
      %s1233 = sshll.u32 [#allocation10], 4
      %s1234 = int_to_ptr.vmem [resolvable:$true] %s1233
      %1239 = dma.vmem_to_hbm [thread:$0]  %s1234, 49152, %s4, [#allocation4], 384, 384, 24
    $region37: #{tpu_custom_call.1} parent=1 // pred_fallthru
      _
    // Predicated region
    $region38: #{tpu_custom_call.1} parent=1 // pred_check
      _
    $region39: #{tpu_custom_call.1} parent=1 // pred_check_branch
      %1241 = sbr.rel (0) target = $region41
    $region40: #{tpu_custom_call.1} parent=1 // pred_region
      %1242 = dma.done [#allocation4], 49152
    $region41: #{tpu_custom_call.1} parent=1 // pred_fallthru
      _
    %1243 = vsyncpa [#allocation3], 1
    %1244 = vsyncpa [#allocation8], 1
    %1245 = vsyncpa [#allocation4], 1
    %1246 = vsyncpa [#allocation5], 1

</llo_original>
